<compile_context>
chip_gen: v6e
topology: v6e:2x2x1
jax: 0.10.0
libtpu: 0.0.40
codegen_flags: <defaults>
</compile_context>

<pallas_src>
import math
import numpy as np
import jax
import jax.numpy as jnp
from jax import lax
from jax.experimental import pallas as pl
from jax.experimental.pallas import tpu as pltpu

_MiB = 1024 * 1024


def _sae_threshold_kernel(x_ref, w_ref, thr_ref, db_ref, out_ref, pre_ref, acc_ref):
    h = pl.program_id(1)

    @pl.when(h == 0)
    def _():
        acc_ref[...] = jnp.zeros_like(acc_ref)

    x = x_ref[...]                                  # (TB, D)
    w = w_ref[...]                                  # (TH, D)

    # Encoder: contract over D directly, (TB, D) . (TH, D) -> (TB, TH).
    pre = lax.dot_general(
        x, w,
        dimension_numbers=(((1,), (1,)), ((), ())),
        preferred_element_type=jnp.float32,
    )

    # Threshold clamp (row-broadcast of (1, TH)).  torch clamp_ is in-place,
    # so the returned "pre_act" is the clamped value.
    post = jnp.maximum(pre, thr_ref[...].astype(jnp.float32))
    pre_ref[...] = post.astype(pre_ref.dtype)

    # Decoder partial product, accumulated in f32 scratch: (TB, TH) @ (TH, D).
    acc_ref[...] += jnp.dot(post.astype(w.dtype), w,
                            preferred_element_type=jnp.float32)

    @pl.when(h == pl.num_programs(1) - 1)
    def _():
        # Decoder bias added exactly once, at finalize.
        out_ref[...] = (acc_ref[...]
                        + db_ref[...].astype(jnp.float32)).astype(out_ref.dtype)


def _physical_vmem_bytes():
    """Best-effort physical VMEM query; conservative (v7x-class) fallback."""
    try:
        return int(pltpu.get_tpu_info().vmem_capacity_bytes)
    except Exception:
        return 64 * _MiB


def _isz(dt):
    return np.dtype(dt).itemsize


def _estimate_vmem_bytes(batch_tile, hidden_tile, D,
                         x_dt, w_dt, thr_dt, db_dt, pre_dt,
                         single_buffer_const):
    nb_const = 1 if single_buffer_const else 2
    return (
        nb_const * batch_tile * D * _isz(x_dt)            # x block (constant over h)
        + 2 * hidden_tile * D * _isz(w_dt)                # streamed W tile
        + 2 * hidden_tile * _isz(thr_dt)                  # streamed threshold tile
        + nb_const * D * _isz(db_dt)                      # decoder bias (constant)
        + nb_const * batch_tile * D * _isz(x_dt)          # out block (resident over h)
        + 2 * batch_tile * hidden_tile * _isz(pre_dt)     # streamed pre_act block
        + batch_tile * D * 4                              # f32 accumulator scratch
    )


def _divisor_tiles(n, candidates):
    return [c for c in candidates if c <= n and n % c == 0]


def _choose_tiles(B, H, D, sub, dtypes, budget, prefer_multi_core_grid,
                  single_buffer_const):
    bt_cands = [c for c in _divisor_tiles(B, (512, 256, 128, 64, 32, 16, 8))
                if c % sub == 0] or [B]
    if prefer_multi_core_grid:
        # Keep grid[0] >= 2 when B allows so both v7x TensorCores get work.
        bt_cands = [c for c in bt_cands if B // c >= 2] or bt_cands
    ht_cands = _divisor_tiles(H, (2048, 1024, 512, 256, 128)) or [H]

    for bt in bt_cands:              # largest batch tile first (less W re-streaming)
        for ht in ht_cands:          # then largest hidden tile that fits VMEM
            if _estimate_vmem_bytes(bt, ht, D, *dtypes, single_buffer_const) <= budget:
                return bt, ht
    return bt_cands[-1], ht_cands[-1]


def sparse_autoencoder_with_threshold_forward(
        x, W, threshold, decoder_bias, *,
        batch_tile=None, hidden_tile=None, pre_act_dtype=None):
    """x: (B, D); W: (H, D); threshold: (H,); decoder_bias: (D,).

    Returns (x_reconstructed (B, D), pre_act (B, H)); pre_act is the
    thresholded activation, matching the in-place clamp_ of the PyTorch module.
    Pass pre_act_dtype=jnp.bfloat16 to halve pre_act HBM writeback when H >> D.
    """
    B, D = x.shape
    H, D2 = W.shape
    assert D == D2
    assert threshold.shape == (H,)
    assert decoder_bias.shape == (D,)

    pre_dtype = x.dtype if pre_act_dtype is None else pre_act_dtype
    sub = 16 if x.dtype == jnp.bfloat16 else 8

    thr = threshold.reshape(1, H)
    db = decoder_bias.reshape(1, D)
    dtypes = (x.dtype, W.dtype, thr.dtype, db.dtype, pre_dtype)

    # Generation-aware VMEM budget.
    phys = _physical_vmem_bytes()
    if phys <= 80 * _MiB:                       # v7x-class: 64 MiB per TensorCore
        budget = max(min(phys - 10 * _MiB, 54 * _MiB), 32 * _MiB)
        prefer_multi_core_grid = True
    else:                                       # v5e / v6e: 128 MiB parts
        budget = max(min(phys - 24 * _MiB, 104 * _MiB), 32 * _MiB)
        prefer_multi_core_grid = False

    auto_bt, auto_ht = _choose_tiles(B, H, D, sub, dtypes, budget,
                                     prefer_multi_core_grid, True)
    if batch_tile is None:
        batch_tile = auto_bt
    if hidden_tile is None:
        hidden_tile = auto_ht

    assert B % batch_tile == 0
    assert batch_tile == B or batch_tile % sub == 0, (
        f"batch_tile={batch_tile} must be a multiple of {sub} or equal B")
    assert H % hidden_tile == 0
    assert hidden_tile == H or hidden_tile % 128 == 0, (
        f"hidden_tile={hidden_tile} must be a multiple of 128 or equal H")

    est_single = _estimate_vmem_bytes(batch_tile, hidden_tile, D, *dtypes, True)
    if est_single > budget:
        raise ValueError(
            f"Tile choice (batch_tile={batch_tile}, hidden_tile={hidden_tile}) needs "
            f"~{est_single / _MiB:.1f} MiB VMEM which exceeds the "
            f"{budget / _MiB:.1f} MiB budget on this TPU; pass smaller tiles.")

    grid = (B // batch_tile, H // hidden_tile)

    flops = 4 * B * H * D  # two (B,H,D) matmuls
    bytes_accessed = (
        x.size * _isz(x.dtype)
        + grid[0] * W.size * _isz(W.dtype)
        + thr.size * _isz(thr.dtype) + db.size * _isz(db.dtype)
        + B * D * _isz(x.dtype) + B * H * _isz(pre_dtype))

    out_shape = (
        jax.ShapeDtypeStruct((B, D), x.dtype),      # reconstruction
        jax.ShapeDtypeStruct((B, H), pre_dtype),    # (thresholded) pre_act
    )

    def _build(single_buffer_const):
        const_kw = {"pipeline_mode": pl.Buffered(1)} if single_buffer_const else {}
        est = _estimate_vmem_bytes(batch_tile, hidden_tile, D, *dtypes,
                                   single_buffer_const)
        hard_cap = max(32 * _MiB,
                       min(budget if single_buffer_const else phys - 8 * _MiB,
                           phys - 8 * _MiB))
        vmem_limit = int(min(max(est + 8 * _MiB, 32 * _MiB), hard_cap))
        return pl.pallas_call(
            _sae_threshold_kernel,
            out_shape=out_shape,
            grid_spec=pltpu.PrefetchScalarGridSpec(
                num_scalar_prefetch=0,
                grid=grid,
                in_specs=[
                    # x: resident over the h (reduction) axis.
                    pl.BlockSpec((batch_tile, D), lambda i, h: (i, 0), **const_kw),
                    # W tile: streamed over h.
                    pl.BlockSpec((hidden_tile, D), lambda i, h: (h, 0)),
                    # threshold tile: streamed over h.
                    pl.BlockSpec((1, hidden_tile), lambda i, h: (0, h)),
                    # decoder bias: constant over the whole grid.
                    pl.BlockSpec((1, D), lambda i, h: (0, 0), **const_kw),
                ],
                out_specs=[
                    # reconstruction: accumulator-resident over h.
                    pl.BlockSpec((batch_tile, D), lambda i, h: (i, 0), **const_kw),
                    # pre_act: streamed over both axes.
                    pl.BlockSpec((batch_tile, hidden_tile), lambda i, h: (i, h)),
                ],
                scratch_shapes=[pltpu.VMEM((batch_tile, D), jnp.float32)],
            ),
            compiler_params=pltpu.CompilerParams(
                dimension_semantics=("parallel", "arbitrary"),
                vmem_limit_bytes=vmem_limit,
            ),
            cost_estimate=pl.CostEstimate(
                flops=flops, transcendentals=0, bytes_accessed=bytes_accessed),
        )

    try:
        out, pre = _build(True)(x, W, thr, db)
    except Exception:
        # Fallback: plain double-buffered specs if pipeline_mode=pl.Buffered(1)
        # is rejected by this jax / Mosaic version.
        out, pre = _build(False)(x, W, thr, db)
    return out, pre


if __name__ == "__main__":
    # Small shapes consistent with the module: batch=64, input_size=128, hidden=256.
    B, D, H = 64, 128, 256
    key = jax.random.PRNGKey(0)
    kx, kw, kt = jax.random.split(key, 3)

    x = jax.random.normal(kx, (B, D), dtype=jnp.float32)

    # Deterministic init mirroring the module's __init__:
    #   kaiming_uniform_(W, a=sqrt(5)) on (H, D): U(-b, b), b = 1/sqrt(D)
    bound = 1.0 / math.sqrt(D)
    W = jax.random.uniform(kw, (H, D), dtype=jnp.float32, minval=-bound, maxval=bound)
    # Non-trivial threshold, as would be installed via set_threshold().
    threshold = jax.random.uniform(kt, (H,), dtype=jnp.float32, minval=-0.2, maxval=0.2)
    decoder_bias = jnp.zeros((D,), dtype=jnp.float32)

    out, pre = sparse_autoencoder_with_threshold_forward(x, W, threshold, decoder_bias)
    jax.block_until_ready(out)
    jax.block_until_ready(pre)

    # Reference at highest precision (clamp_ is in-place => returned pre_act is
    # the clamped tensor).  Tolerance covers the MXU's default-precision f32
    # matmul path (bf16 passes) used inside the kernel.
    ref_pre = jnp.maximum(
        jnp.dot(x, W.T, precision=lax.Precision.HIGHEST), threshold[None, :])
    ref_out = jnp.dot(ref_pre, W, precision=lax.Precision.HIGHEST) + decoder_bias[None, :]
    assert jnp.allclose(pre, ref_pre, atol=2e-2, rtol=2e-2)
    assert jnp.allclose(out, ref_out, atol=2e-2, rtol=2e-2)

    print("KERNEL_OK")
</pallas_src>

<mosaic_0001>
module attributes {stable_mosaic.version = 11 : i64} {
  func.func @_sae_threshold_kernel(%arg0: i32, %arg1: i32, %arg2: memref<32x128xf32, #tpu.memory_space<vmem>>, %arg3: memref<256x128xf32, #tpu.memory_space<vmem>>, %arg4: memref<1x256xf32, #tpu.memory_space<vmem>>, %arg5: memref<1x128xf32, #tpu.memory_space<vmem>>, %arg6: memref<32x128xf32, #tpu.memory_space<vmem>>, %arg7: memref<32x256xf32, #tpu.memory_space<vmem>>, %arg8: memref<32x128xf32, #tpu.memory_space<vmem>>) attributes {dimension_semantics = [#tpu.dimension_semantics<parallel>, #tpu.dimension_semantics<arbitrary>], iteration_bounds = array<i64: 2, 1>, scalar_prefetch = 0 : i64, scratch_operands = 1 : i64, tpu.core_type = #tpu.core_type<tc>, window_params = [{pipeline_mode = #tpu.pipeline_mode<synchronous>, transform_indices = @transform_0, window_bounds = array<i64: 32, 128>}, {transform_indices = @transform_1, window_bounds = array<i64: 256, 128>}, {transform_indices = @transform_2, window_bounds = array<i64: 1, 256>}, {pipeline_mode = #tpu.pipeline_mode<synchronous>, transform_indices = @transform_3, window_bounds = array<i64: 1, 128>}, {pipeline_mode = #tpu.pipeline_mode<synchronous>, transform_indices = @transform_4, window_bounds = array<i64: 32, 128>}, {transform_indices = @transform_5, window_bounds = array<i64: 32, 256>}]} {
    %c0_i32 = arith.constant 0 : i32
    %0 = arith.cmpi eq, %arg1, %c0_i32 : i32
    %1 = arith.extui %0 : i1 to i32
    %c0_i32_0 = arith.constant 0 : i32
    %2 = arith.cmpi ne, %1, %c0_i32_0 : i32
    scf.if %2 {
      %cst_15 = arith.constant 0.000000e+00 : f32
      %17 = vector.broadcast %cst_15 : f32 to vector<32x128xf32>
      %c0_16 = arith.constant 0 : index
      %c0_17 = arith.constant 0 : index
      %18 = vector.load %arg8[%c0_16, %c0_17] : memref<32x128xf32, #tpu.memory_space<vmem>>, vector<32x128xf32>
      tpu.vector_store %arg8[%c0_16, %c0_17], %17 {strides = array<i32>} : memref<32x128xf32, #tpu.memory_space<vmem>>, vector<32x128xf32>,
    } else {
    }
    %c0 = arith.constant 0 : index
    %c0_1 = arith.constant 0 : index
    %3 = vector.load %arg2[%c0, %c0_1] : memref<32x128xf32, #tpu.memory_space<vmem>>, vector<32x128xf32>
    %c0_2 = arith.constant 0 : index
    %c0_3 = arith.constant 0 : index
    %4 = vector.load %arg3[%c0_2, %c0_3] : memref<256x128xf32, #tpu.memory_space<vmem>>, vector<256x128xf32>
    %cst = arith.constant dense<0.000000e+00> : vector<32x256xf32>
    %5 = tpu.matmul %3, %4, %cst {dimension_numbers = #tpu.dot_dimension_numbers<[1], [1], [0], [0], [0, 0, 1, 0], [], []>} : vector<32x128xf32>, vector<256x128xf32>, vector<32x256xf32> -> vector<32x256xf32>
    %c0_4 = arith.constant 0 : index
    %c0_5 = arith.constant 0 : index
    %6 = vector.load %arg4[%c0_4, %c0_5] : memref<1x256xf32, #tpu.memory_space<vmem>>, vector<1x256xf32>
    %7 = vector.broadcast %6 : vector<1x256xf32> to vector<32x256xf32>
    %8 = arith.maximumf %5, %7 : vector<32x256xf32>
    %c0_6 = arith.constant 0 : index
    %c0_7 = arith.constant 0 : index
    %9 = vector.load %arg7[%c0_6, %c0_7] : memref<32x256xf32, #tpu.memory_space<vmem>>, vector<32x256xf32>
    tpu.vector_store %arg7[%c0_6, %c0_7], %8 {strides = array<i32>} : memref<32x256xf32, #tpu.memory_space<vmem>>, vector<32x256xf32>,
    %c0_8 = arith.constant 0 : index
    %c0_9 = arith.constant 0 : index
    %10 = vector.load %arg8[%c0_8, %c0_9] : memref<32x128xf32, #tpu.memory_space<vmem>>, vector<32x128xf32>
    %cst_10 = arith.constant dense<0.000000e+00> : vector<32x128xf32>
    %11 = tpu.matmul %8, %4, %cst_10 {dimension_numbers = #tpu.dot_dimension_numbers<[1], [0], [0], [1], [0, 0, 1, 1], [], []>} : vector<32x256xf32>, vector<256x128xf32>, vector<32x128xf32> -> vector<32x128xf32>
    %12 = arith.addf %10, %11 : vector<32x128xf32>
    %c0_11 = arith.constant 0 : index
    %c0_12 = arith.constant 0 : index
    %13 = vector.load %arg8[%c0_11, %c0_12] : memref<32x128xf32, #tpu.memory_space<vmem>>, vector<32x128xf32>
    tpu.vector_store %arg8[%c0_11, %c0_12], %12 {strides = array<i32>} : memref<32x128xf32, #tpu.memory_space<vmem>>, vector<32x128xf32>,
    %c0_i32_13 = arith.constant 0 : i32
    %14 = arith.cmpi eq, %arg1, %c0_i32_13 : i32
    %15 = arith.extui %14 : i1 to i32
    %c0_i32_14 = arith.constant 0 : i32
    %16 = arith.cmpi ne, %15, %c0_i32_14 : i32
    scf.if %16 {
      %c0_15 = arith.constant 0 : index
      %c0_16 = arith.constant 0 : index
      %17 = vector.load %arg8[%c0_15, %c0_16] : memref<32x128xf32, #tpu.memory_space<vmem>>, vector<32x128xf32>
      %c0_17 = arith.constant 0 : index
      %c0_18 = arith.constant 0 : index
      %18 = vector.load %arg5[%c0_17, %c0_18] : memref<1x128xf32, #tpu.memory_space<vmem>>, vector<1x128xf32>
      %19 = vector.broadcast %18 : vector<1x128xf32> to vector<32x128xf32>
      %20 = arith.addf %17, %19 : vector<32x128xf32>
      %c0_19 = arith.constant 0 : index
      %c0_20 = arith.constant 0 : index
      %21 = vector.load %arg6[%c0_19, %c0_20] : memref<32x128xf32, #tpu.memory_space<vmem>>, vector<32x128xf32>
      tpu.vector_store %arg6[%c0_19, %c0_20], %20 {strides = array<i32>} : memref<32x128xf32, #tpu.memory_space<vmem>>, vector<32x128xf32>,
    } else {
    }
    return
  }
  func.func @transform_0(%arg0: i32, %arg1: i32) -> (i32, i32) {
    %c0_i32 = arith.constant 0 : i32
    %c0_i32_0 = arith.constant 0 : i32
    return %arg0, %c0_i32 : i32, i32
  }
  func.func @transform_1(%arg0: i32, %arg1: i32) -> (i32, i32) {
    %c0_i32 = arith.constant 0 : i32
    %c0_i32_0 = arith.constant 0 : i32
    return %arg1, %c0_i32 : i32, i32
  }
  func.func @transform_2(%arg0: i32, %arg1: i32) -> (i32, i32) {
    %c0_i32 = arith.constant 0 : i32
    %c0_i32_0 = arith.constant 0 : i32
    return %c0_i32, %arg1 : i32, i32
  }
  func.func @transform_3(%arg0: i32, %arg1: i32) -> (i32, i32) {
    %c0_i32 = arith.constant 0 : i32
    %c0_i32_0 = arith.constant 0 : i32
    %c0_i32_1 = arith.constant 0 : i32
    return %c0_i32, %c0_i32_0 : i32, i32
  }
  func.func @transform_4(%arg0: i32, %arg1: i32) -> (i32, i32) {
    %c0_i32 = arith.constant 0 : i32
    %c0_i32_0 = arith.constant 0 : i32
    return %arg0, %c0_i32 : i32, i32
  }
  func.func @transform_5(%arg0: i32, %arg1: i32) -> (i32, i32) {
    %c0_i32 = arith.constant 0 : i32
    return %arg0, %arg1 : i32, i32
  }
}

module attributes {stable_mosaic.version = 11 : i64} {
  func.func @_sae_threshold_kernel(%arg0: i32, %arg1: i32, %arg2: memref<32x128xf32, #tpu.memory_space<vmem>>, %arg3: memref<256x128xf32, #tpu.memory_space<vmem>>, %arg4: memref<1x256xf32, #tpu.memory_space<vmem>>, %arg5: memref<1x128xf32, #tpu.memory_space<vmem>>, %arg6: memref<32x128xf32, #tpu.memory_space<vmem>>, %arg7: memref<32x256xf32, #tpu.memory_space<vmem>>, %arg8: memref<32x128xf32, #tpu.memory_space<vmem>>) attributes {dimension_semantics = [#tpu.dimension_semantics<parallel>, #tpu.dimension_semantics<arbitrary>], iteration_bounds = array<i64: 2, 1>, scalar_prefetch = 0 : i64, scratch_operands = 1 : i64, tpu.core_type = #tpu.core_type<tc>, window_params = [{transform_indices = @transform_0, window_bounds = array<i64: 32, 128>}, {transform_indices = @transform_1, window_bounds = array<i64: 256, 128>}, {transform_indices = @transform_2, window_bounds = array<i64: 1, 256>}, {pipeline_mode = #tpu.pipeline_mode<synchronous>, transform_indices = @transform_3, window_bounds = array<i64: 1, 128>}, {transform_indices = @transform_4, window_bounds = array<i64: 32, 128>}, {transform_indices = @transform_5, window_bounds = array<i64: 32, 256>}]} {
    %c0_i32 = arith.constant 0 : i32
    %0 = arith.cmpi eq, %arg1, %c0_i32 : i32
    %1 = arith.extui %0 : i1 to i32
    %c0_i32_0 = arith.constant 0 : i32
    %2 = arith.cmpi ne, %1, %c0_i32_0 : i32
    scf.if %2 {
      %cst_15 = arith.constant 0.000000e+00 : f32
      %17 = vector.broadcast %cst_15 : f32 to vector<32x128xf32>
      %c0_16 = arith.constant 0 : index
      %c0_17 = arith.constant 0 : index
      %18 = vector.load %arg8[%c0_16, %c0_17] : memref<32x128xf32, #tpu.memory_space<vmem>>, vector<32x128xf32>
      tpu.vector_store %arg8[%c0_16, %c0_17], %17 {strides = array<i32>} : memref<32x128xf32, #tpu.memory_space<vmem>>, vector<32x128xf32>,
    } else {
    }
    %c0 = arith.constant 0 : index
    %c0_1 = arith.constant 0 : index
    %3 = vector.load %arg2[%c0, %c0_1] : memref<32x128xf32, #tpu.memory_space<vmem>>, vector<32x128xf32>
    %c0_2 = arith.constant 0 : index
    %c0_3 = arith.constant 0 : index
    %4 = vector.load %arg3[%c0_2, %c0_3] : memref<256x128xf32, #tpu.memory_space<vmem>>, vector<256x128xf32>
    %cst = arith.constant dense<0.000000e+00> : vector<32x256xf32>
    %5 = tpu.matmul %3, %4, %cst {dimension_numbers = #tpu.dot_dimension_numbers<[1], [1], [0], [0], [0, 0, 1, 0], [], []>} : vector<32x128xf32>, vector<256x128xf32>, vector<32x256xf32> -> vector<32x256xf32>
    %c0_4 = arith.constant 0 : index
    %c0_5 = arith.constant 0 : index
    %6 = vector.load %arg4[%c0_4, %c0_5] : memref<1x256xf32, #tpu.memory_space<vmem>>, vector<1x256xf32>
    %7 = vector.broadcast %6 : vector<1x256xf32> to vector<32x256xf32>
    %8 = arith.maximumf %5, %7 : vector<32x256xf32>
    %c0_6 = arith.constant 0 : index
    %c0_7 = arith.constant 0 : index
    %9 = vector.load %arg7[%c0_6, %c0_7] : memref<32x256xf32, #tpu.memory_space<vmem>>, vector<32x256xf32>
    tpu.vector_store %arg7[%c0_6, %c0_7], %8 {strides = array<i32>} : memref<32x256xf32, #tpu.memory_space<vmem>>, vector<32x256xf32>,
    %c0_8 = arith.constant 0 : index
    %c0_9 = arith.constant 0 : index
    %10 = vector.load %arg8[%c0_8, %c0_9] : memref<32x128xf32, #tpu.memory_space<vmem>>, vector<32x128xf32>
    %cst_10 = arith.constant dense<0.000000e+00> : vector<32x128xf32>
    %11 = tpu.matmul %8, %4, %cst_10 {dimension_numbers = #tpu.dot_dimension_numbers<[1], [0], [0], [1], [0, 0, 1, 1], [], []>} : vector<32x256xf32>, vector<256x128xf32>, vector<32x128xf32> -> vector<32x128xf32>
    %12 = arith.addf %10, %11 : vector<32x128xf32>
    %c0_11 = arith.constant 0 : index
    %c0_12 = arith.constant 0 : index
    %13 = vector.load %arg8[%c0_11, %c0_12] : memref<32x128xf32, #tpu.memory_space<vmem>>, vector<32x128xf32>
    tpu.vector_store %arg8[%c0_11, %c0_12], %12 {strides = array<i32>} : memref<32x128xf32, #tpu.memory_space<vmem>>, vector<32x128xf32>,
    %c0_i32_13 = arith.constant 0 : i32
    %14 = arith.cmpi eq, %arg1, %c0_i32_13 : i32
    %15 = arith.extui %14 : i1 to i32
    %c0_i32_14 = arith.constant 0 : i32
    %16 = arith.cmpi ne, %15, %c0_i32_14 : i32
    scf.if %16 {
      %c0_15 = arith.constant 0 : index
      %c0_16 = arith.constant 0 : index
      %17 = vector.load %arg8[%c0_15, %c0_16] : memref<32x128xf32, #tpu.memory_space<vmem>>, vector<32x128xf32>
      %c0_17 = arith.constant 0 : index
      %c0_18 = arith.constant 0 : index
      %18 = vector.load %arg5[%c0_17, %c0_18] : memref<1x128xf32, #tpu.memory_space<vmem>>, vector<1x128xf32>
      %19 = vector.broadcast %18 : vector<1x128xf32> to vector<32x128xf32>
      %20 = arith.addf %17, %19 : vector<32x128xf32>
      %c0_19 = arith.constant 0 : index
      %c0_20 = arith.constant 0 : index
      %21 = vector.load %arg6[%c0_19, %c0_20] : memref<32x128xf32, #tpu.memory_space<vmem>>, vector<32x128xf32>
      tpu.vector_store %arg6[%c0_19, %c0_20], %20 {strides = array<i32>} : memref<32x128xf32, #tpu.memory_space<vmem>>, vector<32x128xf32>,
    } else {
    }
    return
  }
  func.func @transform_0(%arg0: i32, %arg1: i32) -> (i32, i32) {
    %c0_i32 = arith.constant 0 : i32
    %c0_i32_0 = arith.constant 0 : i32
    return %arg0, %c0_i32 : i32, i32
  }
  func.func @transform_1(%arg0: i32, %arg1: i32) -> (i32, i32) {
    %c0_i32 = arith.constant 0 : i32
    %c0_i32_0 = arith.constant 0 : i32
    return %arg1, %c0_i32 : i32, i32
  }
  func.func @transform_2(%arg0: i32, %arg1: i32) -> (i32, i32) {
    %c0_i32 = arith.constant 0 : i32
    %c0_i32_0 = arith.constant 0 : i32
    return %c0_i32, %arg1 : i32, i32
  }
  func.func @transform_3(%arg0: i32, %arg1: i32) -> (i32, i32) {
    %c0_i32 = arith.constant 0 : i32
    %c0_i32_0 = arith.constant 0 : i32
    %c0_i32_1 = arith.constant 0 : i32
    return %c0_i32, %c0_i32_0 : i32, i32
  }
  func.func @transform_4(%arg0: i32, %arg1: i32) -> (i32, i32) {
    %c0_i32 = arith.constant 0 : i32
    %c0_i32_0 = arith.constant 0 : i32
    return %arg0, %c0_i32 : i32, i32
  }
  func.func @transform_5(%arg0: i32, %arg1: i32) -> (i32, i32) {
    %c0_i32 = arith.constant 0 : i32
    return %arg0, %arg1 : i32, i32
  }
}

</mosaic_0001>

<llo_original>
// kernel: tpu_custom_call.1
$region0: #{tpu_custom_call.1}
  #allocation0 [shape = 'u32[]', space=smem, size = 0x4, offset = 0x4, fixed_abs, tag = 'smem constant byte address 0x4 - core index']
  #allocation1 [shape = 'u32[144,128]{1,0:T(1,128)}', space=vmem, size = 0x12000, scoped, tag = 'internal scratch']
  #allocation2 [shape = 'f32[32,128]{1,0:T(8,128)}', space=vmem, size = 0x4000, scoped, tag = 'scratch operand']
  %s0 = inlined_call_operand.hbm [shape: f32[64,128], index: 0, kind: input, shape index: {}]
  %s1 = inlined_call_operand.hbm [shape: f32[256,128], index: 1, kind: input, shape index: {}]
  %s2 = inlined_call_operand.vmem [shape: f32[1,256], index: 2, kind: input, shape index: {}]
  %s3 = inlined_call_operand.vmem [shape: f32[1,128], index: 3, kind: input, shape index: {}]
  %s4 = inlined_call_operand.hbm [shape: f32[64,128], index: 4, kind: output, shape index: {0}]
  %s5 = inlined_call_operand.hbm [shape: f32[64,256], index: 5, kind: output, shape index: {1}]
  %6 = xla_tuple %s4, %s5
  %s7 = sld [smem:[#allocation0]]
  $region73: #{tpu_custom_call.1} parent=0
    _
  %s9 = ssub.s32 1, %s7
  %s10 = scalar_select 0, %s9, %s7
  $region1: #{tpu_custom_call.1} parent=0
    #allocation3 [shape = 'u8[16384]{0}', space=vmem, size = 0x4000, scoped, tag = 'input window, operand 0, single buffered']
    #allocation4 [shape = 's32[2]{0}', space=sflag, size = 0x8, scoped, tag = 'scoped memory for tpu_custom_call.1']
    #allocation5 [shape = 's32[2]{0}', space=sflag, size = 0x8, scoped, tag = 'scoped memory for tpu_custom_call.1']
    #allocation6 [shape = 'u8[131072]{0}', space=vmem, size = 0x20000, scoped, tag = 'input window, operand 1, single buffered']
    #allocation7 [shape = 's32[1]{0}', space=sflag, size = 0x4, scoped, tag = 'scoped memory for tpu_custom_call.1']
    #allocation8 [shape = 'u8[16384]{0}', space=vmem, size = 0x4000, scoped, tag = 'output window, operand 0, single buffered']
    #allocation9 [shape = 'u8[65536]{0}', space=vmem, size = 0x10000, scoped, tag = 'output window, operand 1']
    #allocation10 [shape = 's32[2]{0}', space=sflag, size = 0x8, scoped, tag = 'scoped memory for tpu_custom_call.1']
    %11 = vsyncpa [#allocation4], 0
    %12 = vsyncpa [#allocation7], 0
    %13 = vsyncpa [#allocation5], 0
    %14 = vsyncpa [#allocation10], 0
    %s15 = scalar_lea.sflag [#allocation10], 1
    %16 = vsyncpa %s15, 0
    loop: start=0, step=1, limit=4
    $region2: #{tpu_custom_call.1} parent=1 // loop_pre_header
      _
    $region3: #{tpu_custom_call.1} parent=1 // loop_header
      %s18 = sphi 0, %s22
      %p19 = scmp.ge.s32.totalorder %s18, 4
      %s25 = sphi 0, %s37
      %s26 = sphi 0, %s33
      %s27 = sphi 0, %s25
      %s28 = sphi 0, %s26
      %s29 = sphi 0, %s27
      %s30 = sphi 0, %s28
      %s40 = sphi 0, %s42
      %s43 = sphi 0, %s40
      %s44 = sphi 0, %s43
      %s60 = sphi 0, %s44
      %s66 = sphi 0, %s68
      %s69 = sphi 0, %s66
      %s70 = sphi 0, %s69
      %s86 = sphi 0, %s70
      %s92 = sphi 0, %s94
      %s95 = sphi 0, %s92
      %s96 = sphi 0, %s95
      %s112 = sphi 0, %s96
      %s116 = sphi 0, %s116
      %s118 = sphi 0, %s116
      %s119 = sphi 0, %s118
      %s133 = sphi 0, %s119
      %s139 = sphi 0, %s141
      %s142 = sphi 0, %s139
      %s143 = sphi 0, %s142
      %s159 = sphi 0, %s143
      %s167 = sphi 0, %s169
      %s170 = sphi 0, %s167
      %s171 = sphi 0, %s170
      %s187 = sphi 0, %s171
    $region4: #{tpu_custom_call.1} parent=1 // loop_header_branch
      %21 = sbr.rel (%p19) target = $region8
    $region5: #{tpu_custom_call.1} parent=1 // loop_body
      %s23 = ssub.s32 %s18, 1
      %s24 = ssub.s32 %s18, 2
      %s31 = sadd.s32 1, %s26
      %p32 = scmp.ge.s32.totalorder %s31, 1
      %s33 = scalar_select %p32, 0, %s31
      %s34 = sadd.s32 1, %s25
      %s35 = scalar_select %p32, %s34, %s25
      %p36 = scmp.ge.s32.totalorder %s35, 2
      %s37 = scalar_select %p36, 0, %s35
      %s38 = ssub.s32 %s25, %s37
      %p39 = scmp.eq.s32.totalorder %s38, 0
      %s41 = sadd.s32 %s40, 1
      %s42 = scalar_select %p39, %s40, %s41
      %p45 = pneg %p39
      %p46 = scmp.eq.s32.totalorder %s18, 1
      %p47 = por %p45, %p46
      %p48 = scmp.ne.s32.totalorder %s40, %s43
      %p49 = scmp.eq.s32.totalorder %s18, 0
      %p50 = por %p48, %p49
      %p51 = scmp.ne.s32.totalorder %s40, %s43
      %p52 = scmp.eq.s32.totalorder %s23, 1
      %p53 = por %p51, %p52
      %p54 = scmp.ne.s32.totalorder %s43, %s44
      %p55 = scmp.eq.s32.totalorder %s23, 0
      %p56 = por %p54, %p55
      %p57 = scmp.ne.s32.totalorder %s43, %s44
      %p58 = scmp.eq.s32.totalorder %s24, 1
      %p59 = por %p57, %p58
      %p61 = scmp.ne.s32.totalorder %s44, %s60
      %p62 = scmp.eq.s32.totalorder %s24, 0
      %p63 = por %p61, %p62
      %s64 = ssub.s32 %s26, %s33
      %p65 = scmp.eq.s32.totalorder %s64, 0
      %s67 = sadd.s32 %s66, 1
      %s68 = scalar_select %p65, %s66, %s67
      %p71 = pneg %p65
      %p72 = scmp.eq.s32.totalorder %s18, 1
      %p73 = por %p71, %p72
      %p74 = scmp.ne.s32.totalorder %s66, %s69
      %p75 = scmp.eq.s32.totalorder %s18, 0
      %p76 = por %p74, %p75
      %p77 = scmp.ne.s32.totalorder %s66, %s69
      %p78 = scmp.eq.s32.totalorder %s23, 1
      %p79 = por %p77, %p78
      %p80 = scmp.ne.s32.totalorder %s69, %s70
      %p81 = scmp.eq.s32.totalorder %s23, 0
      %p82 = por %p80, %p81
      %p83 = scmp.ne.s32.totalorder %s69, %s70
      %p84 = scmp.eq.s32.totalorder %s24, 1
      %p85 = por %p83, %p84
      %p87 = scmp.ne.s32.totalorder %s70, %s86
      %p88 = scmp.eq.s32.totalorder %s24, 0
      %p89 = por %p87, %p88
      %s90 = ssub.s32 %s26, %s33
      %p91 = scmp.eq.s32.totalorder %s90, 0
      %s93 = sadd.s32 %s92, 1
      %s94 = scalar_select %p91, %s92, %s93
      %p97 = pneg %p91
      %p98 = scmp.eq.s32.totalorder %s18, 1
      %p99 = por %p97, %p98
      %p100 = scmp.ne.s32.totalorder %s92, %s95
      %p101 = scmp.eq.s32.totalorder %s18, 0
      %p102 = por %p100, %p101
      %p103 = scmp.ne.s32.totalorder %s92, %s95
      %p104 = scmp.eq.s32.totalorder %s23, 1
      %p105 = por %p103, %p104
      %p106 = scmp.ne.s32.totalorder %s95, %s96
      %p107 = scmp.eq.s32.totalorder %s23, 0
      %p108 = por %p106, %p107
      %p109 = scmp.ne.s32.totalorder %s95, %s96
      %p110 = scmp.eq.s32.totalorder %s24, 1
      %p111 = por %p109, %p110
      %p113 = scmp.ne.s32.totalorder %s96, %s112
      %p114 = scmp.eq.s32.totalorder %s24, 0
      %p115 = por %p113, %p114
      %s117 = sadd.s32 %s116, 1
      %p120 = scmp.eq.s32.totalorder %s18, 1
      %p121 = scmp.ne.s32.totalorder %s116, %s118
      %p122 = scmp.eq.s32.totalorder %s18, 0
      %p123 = por %p121, %p122
      %p124 = scmp.ne.s32.totalorder %s116, %s118
      %p125 = scmp.eq.s32.totalorder %s23, 1
      %p126 = por %p124, %p125
      %p127 = scmp.ne.s32.totalorder %s118, %s119
      %p128 = scmp.eq.s32.totalorder %s23, 0
      %p129 = por %p127, %p128
      %p130 = scmp.ne.s32.totalorder %s118, %s119
      %p131 = scmp.eq.s32.totalorder %s24, 1
      %p132 = por %p130, %p131
      %p134 = scmp.ne.s32.totalorder %s119, %s133
      %p135 = scmp.eq.s32.totalorder %s24, 0
      %p136 = por %p134, %p135
      %s137 = ssub.s32 %s25, %s37
      %p138 = scmp.eq.s32.totalorder %s137, 0
      %s140 = sadd.s32 %s139, 1
      %s141 = scalar_select %p138, %s139, %s140
      %p144 = pneg %p138
      %p145 = scmp.eq.s32.totalorder %s18, 1
      %p146 = por %p144, %p145
      %p147 = scmp.ne.s32.totalorder %s139, %s142
      %p148 = scmp.eq.s32.totalorder %s18, 0
      %p149 = por %p147, %p148
      %p150 = scmp.ne.s32.totalorder %s139, %s142
      %p151 = scmp.eq.s32.totalorder %s23, 1
      %p152 = por %p150, %p151
      %p153 = scmp.ne.s32.totalorder %s142, %s143
      %p154 = scmp.eq.s32.totalorder %s23, 0
      %p155 = por %p153, %p154
      %p156 = scmp.ne.s32.totalorder %s142, %s143
      %p157 = scmp.eq.s32.totalorder %s24, 1
      %p158 = por %p156, %p157
      %p160 = scmp.ne.s32.totalorder %s143, %s159
      %p161 = scmp.eq.s32.totalorder %s24, 0
      %p162 = por %p160, %p161
      %s163 = ssub.s32 %s25, %s37
      %s164 = ssub.s32 %s26, %s33
      %s165 = sor.u32 %s163, %s164
      %p166 = scmp.eq.s32.totalorder %s165, 0
      %s168 = sadd.s32 %s167, 1
      %s169 = scalar_select %p166, %s167, %s168
      %p172 = pneg %p166
      %p173 = scmp.eq.s32.totalorder %s18, 1
      %p174 = por %p172, %p173
      %p175 = scmp.ne.s32.totalorder %s167, %s170
      %p176 = scmp.eq.s32.totalorder %s18, 0
      %p177 = por %p175, %p176
      %p178 = scmp.ne.s32.totalorder %s167, %s170
      %p179 = scmp.eq.s32.totalorder %s23, 1
      %p180 = por %p178, %p179
      %p181 = scmp.ne.s32.totalorder %s170, %s171
      %p182 = scmp.eq.s32.totalorder %s23, 0
      %p183 = por %p181, %p182
      %p184 = scmp.ne.s32.totalorder %s170, %s171
      %p185 = scmp.eq.s32.totalorder %s24, 1
      %p186 = por %p184, %p185
      %p188 = scmp.ne.s32.totalorder %s171, %s187
      %p189 = scmp.eq.s32.totalorder %s24, 0
      %p190 = por %p188, %p189
      %p191 = scmp.le.s32.totalorder 1, %s18
      %p192 = scmp.lt.s32.totalorder %s18, 3
      %p193 = pnand %p191, %p192
      %p194 = pneg %p193
      // Predicated region
      $region9: #{tpu_custom_call.1} parent=5 // pred_check
        _
      $region10: #{tpu_custom_call.1} parent=5 // pred_check_branch
        %196 = sbr.rel (%p193) target = $region12
      $region11: #{tpu_custom_call.1} parent=5 // pred_region
        %s197 = ssub.s32 %s18, 1
        // Predicated region
        $region13: #{tpu_custom_call.1} parent=11 // pred_check
          %p198 = pneg %p56
        $region14: #{tpu_custom_call.1} parent=11 // pred_check_branch
          %200 = sbr.rel (%p198) target = $region16
        $region15: #{tpu_custom_call.1} parent=11 // pred_region
          %s201 = smul.u32 4, %s27
          %s203 = ssub.s32 512, 512
          %204 = vsyncadd [#allocation4], %s203
          %s205 = smul.addr %s201, 128
          %s206 = scalar_lea.hbm %s0, %s205
          %s207 = sshll.u32 [#allocation3], 4
          %s208 = int_to_ptr.vmem [resolvable:$true] %s207
          %213 = dma.hbm_to_vmem [thread:$0]  %s206, 512, %s208, [#allocation4], 128, 128, 8
        $region16: #{tpu_custom_call.1} parent=11 // pred_fallthru
          _
        // Predicated region
        $region17: #{tpu_custom_call.1} parent=11 // pred_check
          %p214 = pneg %p82
        $region18: #{tpu_custom_call.1} parent=11 // pred_check_branch
          %216 = sbr.rel (%p214) target = $region20
        $region19: #{tpu_custom_call.1} parent=11 // pred_region
          %s217 = smul.u32 32, %s28
          %s219 = ssub.s32 4096, 4096
          %220 = vsyncadd [#allocation7], %s219
          %s221 = smul.addr %s217, 128
          %s222 = scalar_lea.hbm %s1, %s221
          %s223 = sshll.u32 [#allocation6], 4
          %s224 = int_to_ptr.vmem [resolvable:$true] %s223
          %229 = dma.hbm_to_vmem [thread:$0]  %s222, 4096, %s224, [#allocation7], 128, 128, 8
        $region20: #{tpu_custom_call.1} parent=11 // pred_fallthru
          _
        // Predicated region
        $region21: #{tpu_custom_call.1} parent=11 // pred_check
          %p230 = pneg %p108
        $region22: #{tpu_custom_call.1} parent=11 // pred_check_branch
          %232 = sbr.rel (%p230) target = $region24
        $region23: #{tpu_custom_call.1} parent=11 // pred_region
          %s233 = smul.u32 2, %s28
          %p234 = scmp.lt.s32.totalorder %s233, 1
          %s235 = scalar_select %p234, %s233, 1
          %s236 = scalar_lea.vmem %s2, %s235
          %s237 = smul.u32 2, %s28
        $region24: #{tpu_custom_call.1} parent=11 // pred_fallthru
          _
        // Predicated region
        $region25: #{tpu_custom_call.1} parent=11 // pred_check
          %p238 = pneg %p129
        $region26: #{tpu_custom_call.1} parent=11 // pred_check_branch
          %240 = sbr.rel (%p238) target = $region28
        $region27: #{tpu_custom_call.1} parent=11 // pred_region
          _
        $region28: #{tpu_custom_call.1} parent=11 // pred_fallthru
          _
      $region12: #{tpu_custom_call.1} parent=5 // pred_fallthru
        _
      %p241 = scmp.lt.s32.totalorder %s18, 2
      // Predicated region
      $region29: #{tpu_custom_call.1} parent=5 // pred_check
        %p242 = pneg %p241
      $region30: #{tpu_custom_call.1} parent=5 // pred_check_branch
        %244 = sbr.rel (%p242) target = $region32
      $region31: #{tpu_custom_call.1} parent=5 // pred_region
        _
      $region32: #{tpu_custom_call.1} parent=5 // pred_fallthru
        _
      %p245 = scmp.le.s32.totalorder 1, %s18
      %p246 = scmp.lt.s32.totalorder %s18, 3
      %p247 = pnand %p245, %p246
      %p248 = pneg %p247
      // Predicated region
      $region33: #{tpu_custom_call.1} parent=5 // pred_check
        _
      $region34: #{tpu_custom_call.1} parent=5 // pred_check_branch
        %250 = sbr.rel (%p247) target = $region36
      $region35: #{tpu_custom_call.1} parent=5 // pred_region
        %s251 = ssub.s32 %s18, 1
        // Predicated region
        $region37: #{tpu_custom_call.1} parent=35 // pred_check
          %p252 = pneg %p56
        $region38: #{tpu_custom_call.1} parent=35 // pred_check_branch
          %254 = sbr.rel (%p252) target = $region40
        $region39: #{tpu_custom_call.1} parent=35 // pred_region
          %255 = dma.done [#allocation4], 512
        $region40: #{tpu_custom_call.1} parent=35 // pred_fallthru
          _
        // Predicated region
        $region41: #{tpu_custom_call.1} parent=35 // pred_check
          %p256 = pneg %p82
        $region42: #{tpu_custom_call.1} parent=35 // pred_check_branch
          %258 = sbr.rel (%p256) target = $region44
        $region43: #{tpu_custom_call.1} parent=35 // pred_region
          %259 = dma.done [#allocation7], 4096
        $region44: #{tpu_custom_call.1} parent=35 // pred_fallthru
          _
        %p260 = pneg %p56
        %p261 = pneg %p53
        %p262 = pneg %p82
        %p263 = pneg %p79
        %s264 = smul.u32 2, %s28
        %p265 = scmp.lt.s32.totalorder %s264, 1
        %s266 = scalar_select %p265, %s264, 1
        %s267 = scalar_lea.vmem %s2, %s266
        %p268 = pneg %p108
        %p269 = pneg %p105
        %p270 = pneg %p129
        %p271 = pneg %p126
        %p272 = pneg %p155
        %p273 = pneg %p152
        %p274 = pneg %p183
        %p275 = pneg %p180
        %s276 = sand.u32 %s170, 1
        %s277 = scalar_lea.sflag [#allocation10], %s276
        %s278 = sand.u32 %s170, 1
        %s279 = smul.addr %s278, 64
        %s280 = scalar_lea.vmem [#allocation9], %s279
        %s281 = smul.u32 4, %s27
        %s282 = smul.u32 32, %s28
        %s283 = smul.u32 2, %s28
        %p284 = scmp.lt.s32.totalorder %s283, 1
        %s285 = scalar_select %p284, %s283, 1
        %s286 = scalar_lea.vmem %s2, %s285
        %s287 = smul.u32 2, %s28
        %s288 = smul.u32 4, %s27
        %s289 = smul.u32 4, %s27
        %s290 = smul.u32 2, %s28
        %p291 = scmp.eq.s32.totalorder %s28, 0
        // Predicated region
        $region45: #{tpu_custom_call.1} parent=35 // pred_check
          %p292 = pneg %p291
        $region46: #{tpu_custom_call.1} parent=35 // pred_check_branch
          %294 = sbr.rel (%p292) target = $region48
        $region47: #{tpu_custom_call.1} parent=35 // pred_region
          %295 = vst [vmem:[#allocation2] sm:$0xff] 0.0
          %296 = vst [vmem:[#allocation2 + $0x8] sm:$0xff] 0.0
          %297 = vst [vmem:[#allocation2 + $0x10] sm:$0xff] 0.0
          %298 = vst [vmem:[#allocation2 + $0x18] sm:$0xff] 0.0
        $region48: #{tpu_custom_call.1} parent=35 // pred_fallthru
          _
        %v299 = vld [vmem:[#allocation3] sm:$0xff]
        %v300 = vld [vmem:[#allocation3 + $0x8] sm:$0xff]
        %v301 = vld [vmem:[#allocation3 + $0x10] sm:$0xff]
        %v302 = vld [vmem:[#allocation3 + $0x18] sm:$0xff]
        %v303 = vld [vmem:[#allocation6] sm:$0xff]
        %v304 = vld [vmem:[#allocation6 + $0x8] sm:$0xff]
        %v305 = vld [vmem:[#allocation6 + $0x10] sm:$0xff]
        %v306 = vld [vmem:[#allocation6 + $0x18] sm:$0xff]
        %v307 = vld [vmem:[#allocation6 + $0x20] sm:$0xff]
        %v308 = vld [vmem:[#allocation6 + $0x28] sm:$0xff]
        %v309 = vld [vmem:[#allocation6 + $0x30] sm:$0xff]
        %v310 = vld [vmem:[#allocation6 + $0x38] sm:$0xff]
        %v311 = vld [vmem:[#allocation6 + $0x40] sm:$0xff]
        %v312 = vld [vmem:[#allocation6 + $0x48] sm:$0xff]
        %v313 = vld [vmem:[#allocation6 + $0x50] sm:$0xff]
        %v314 = vld [vmem:[#allocation6 + $0x58] sm:$0xff]
        %v315 = vld [vmem:[#allocation6 + $0x60] sm:$0xff]
        %v316 = vld [vmem:[#allocation6 + $0x68] sm:$0xff]
        %v317 = vld [vmem:[#allocation6 + $0x70] sm:$0xff]
        %v318 = vld [vmem:[#allocation6 + $0x78] sm:$0xff]
        %v319 = vld [vmem:[#allocation6 + $0x80] sm:$0xff]
        %v320 = vld [vmem:[#allocation6 + $0x88] sm:$0xff]
        %v321 = vld [vmem:[#allocation6 + $0x90] sm:$0xff]
        %v322 = vld [vmem:[#allocation6 + $0x98] sm:$0xff]
        %v323 = vld [vmem:[#allocation6 + $0xa0] sm:$0xff]
        %v324 = vld [vmem:[#allocation6 + $0xa8] sm:$0xff]
        %v325 = vld [vmem:[#allocation6 + $0xb0] sm:$0xff]
        %v326 = vld [vmem:[#allocation6 + $0xb8] sm:$0xff]
        %v327 = vld [vmem:[#allocation6 + $0xc0] sm:$0xff]
        %v328 = vld [vmem:[#allocation6 + $0xc8] sm:$0xff]
        %v329 = vld [vmem:[#allocation6 + $0xd0] sm:$0xff]
        %v330 = vld [vmem:[#allocation6 + $0xd8] sm:$0xff]
        %v331 = vld [vmem:[#allocation6 + $0xe0] sm:$0xff]
        %v332 = vld [vmem:[#allocation6 + $0xe8] sm:$0xff]
        %v333 = vld [vmem:[#allocation6 + $0xf0] sm:$0xff]
        %v334 = vld [vmem:[#allocation6 + $0xf8] sm:$0xff]
        %335 = vmatprep.subr.mxu0 0.0
        %336 = vmatpush1.xpose.msra.mxu0 %v318
        %337 = vmatprep.subr.mxu0 0.0
        %338 = vmatpush1.xpose.msra.mxu0 %v317
        %339 = vmatprep.subr.mxu0 0.0
        %340 = vmatpush1.xpose.msra.mxu0 %v316
        %341 = vmatprep.subr.mxu0 0.0
        %342 = vmatpush1.xpose.msra.mxu0 %v315
        %343 = vmatprep.subr.mxu0 0.0
        %344 = vmatpush1.xpose.msra.mxu0 %v314
        %345 = vmatprep.subr.mxu0 0.0
        %346 = vmatpush1.xpose.msra.mxu0 %v313
        %347 = vmatprep.subr.mxu0 0.0
        %348 = vmatpush1.xpose.msra.mxu0 %v312
        %349 = vmatprep.subr.mxu0 0.0
        %350 = vmatpush1.xpose.msra.mxu0 %v311
        %351 = vmatprep.subr.mxu0 0.0
        %352 = vmatpush1.xpose.msra.mxu0 %v310
        %353 = vmatprep.subr.mxu0 0.0
        %354 = vmatpush1.xpose.msra.mxu0 %v309
        %355 = vmatprep.subr.mxu0 0.0
        %356 = vmatpush1.xpose.msra.mxu0 %v308
        %357 = vmatprep.subr.mxu0 0.0
        %358 = vmatpush1.xpose.msra.mxu0 %v307
        %359 = vmatprep.subr.mxu0 0.0
        %360 = vmatpush1.xpose.msra.mxu0 %v306
        %361 = vmatprep.subr.mxu0 0.0
        %362 = vmatpush1.xpose.msra.mxu0 %v305
        %363 = vmatprep.subr.mxu0 0.0
        %364 = vmatpush1.xpose.msra.mxu0 %v304
        %365 = vmatprep.subr.mxu0 0.0
        %366 = vmatpush1.xpose.msra.mxu0 %v303
        %367 = vmatprep.subr.mxu0 0.0
        %368 = vmatpush2.xpose.msra.mxu0 %v334
        %369 = vmatprep.subr.mxu0 0.0
        %370 = vmatpush2.xpose.msra.mxu0 %v333
        %371 = vmatprep.subr.mxu0 0.0
        %372 = vmatpush2.xpose.msra.mxu0 %v332
        %373 = vmatprep.subr.mxu0 0.0
        %374 = vmatpush2.xpose.msra.mxu0 %v331
        %375 = vmatprep.subr.mxu0 0.0
        %376 = vmatpush2.xpose.msra.mxu0 %v330
        %377 = vmatprep.subr.mxu0 0.0
        %378 = vmatpush2.xpose.msra.mxu0 %v329
        %379 = vmatprep.subr.mxu0 0.0
        %380 = vmatpush2.xpose.msra.mxu0 %v328
        %381 = vmatprep.subr.mxu0 0.0
        %382 = vmatpush2.xpose.msra.mxu0 %v327
        %383 = vmatprep.subr.mxu0 0.0
        %384 = vmatpush2.xpose.msra.mxu0 %v326
        %385 = vmatprep.subr.mxu0 0.0
        %386 = vmatpush2.xpose.msra.mxu0 %v325
        %387 = vmatprep.subr.mxu0 0.0
        %388 = vmatpush2.xpose.msra.mxu0 %v324
        %389 = vmatprep.subr.mxu0 0.0
        %390 = vmatpush2.xpose.msra.mxu0 %v323
        %391 = vmatprep.subr.mxu0 0.0
        %392 = vmatpush2.xpose.msra.mxu0 %v322
        %393 = vmatprep.subr.mxu0 0.0
        %394 = vmatpush2.xpose.msra.mxu0 %v321
        %395 = vmatprep.subr.mxu0 0.0
        %396 = vmatpush2.xpose.msra.mxu0 %v320
        %397 = vmatprep.subr.mxu0 0.0
        %398 = vmatpush2.xpose.msra.mxu0 %v319
        %399 = vmatprep.mubr.f32.mxu0 0.0
        %400 = vmatmul.mubr.f32.gmra.mxu0 %v299
        %v401 = vpop.f32.mrf.mxu0
        %v402 = vadd.f32 0.0, %v401
        %v403 = vpop.f32.mrf.mxu0
        %v404 = vadd.f32 0.0, %v403
        %405 = vmatprep.mubr.f32.mxu0 0.0
        %406 = vmatmul.mubr.f32.gmra.mxu0 %v300
        %v407 = vpop.f32.mrf.mxu0
        %v408 = vadd.f32 0.0, %v407
        %v409 = vpop.f32.mrf.mxu0
        %v410 = vadd.f32 0.0, %v409
        %411 = vmatprep.mubr.f32.mxu0 0.0
        %412 = vmatmul.mubr.f32.gmra.mxu0 %v301
        %v413 = vpop.f32.mrf.mxu0
        %v414 = vadd.f32 0.0, %v413
        %v415 = vpop.f32.mrf.mxu0
        %v416 = vadd.f32 0.0, %v415
        %417 = vmatprep.mubr.f32.mxu0 0.0
        %418 = vmatmul.mubr.f32.gmra.mxu0 %v302
        %v419 = vpop.f32.mrf.mxu0
        %v420 = vadd.f32 0.0, %v419
        %v421 = vpop.f32.mrf.mxu0
        %v422 = vadd.f32 0.0, %v421
        %423 = vdwg.mxu0
        %v424 = vld [vmem:[%s286] sm:$0x3]
        %v426 = vlaneseq
        %v427 = vshrl.u32 %v426, 7
        %v428 = vsub.s32 0, %v427
        %v429 = vrot.slane %v424, %v428
        %v430 = vlaneseq
        %v431 = vshrl.u32 %v430, 7
        %v432 = vsub.s32 1, %v431
        %v433 = vrot.slane %v424, %v432
        %v436 = vmax.f32 %v402, %v429
        %v437 = vmax.f32 %v404, %v433
        %v438 = vmax.f32 %v408, %v429
        %v439 = vmax.f32 %v410, %v433
        %v440 = vmax.f32 %v414, %v429
        %v441 = vmax.f32 %v416, %v433
        %v442 = vmax.f32 %v420, %v429
        %v443 = vmax.f32 %v422, %v433
        %444 = vst [vmem:[%s280] sm:$0xff] %v436
        %445 = vst [vmem:[%s280 + $0x8] sm:$0xff] %v437
        %446 = vst [vmem:[%s280 + $0x10] sm:$0xff] %v438
        %447 = vst [vmem:[%s280 + $0x18] sm:$0xff] %v439
        %448 = vst [vmem:[%s280 + $0x20] sm:$0xff] %v440
        %449 = vst [vmem:[%s280 + $0x28] sm:$0xff] %v441
        %450 = vst [vmem:[%s280 + $0x30] sm:$0xff] %v442
        %451 = vst [vmem:[%s280 + $0x38] sm:$0xff] %v443
        %v452 = vld [vmem:[#allocation2] sm:$0xff]
        %v453 = vld [vmem:[#allocation2 + $0x8] sm:$0xff]
        %v454 = vld [vmem:[#allocation2 + $0x10] sm:$0xff]
        %v455 = vld [vmem:[#allocation2 + $0x18] sm:$0xff]
        %456 = vmatprep.subr.mxu0 0.0
        %457 = vmatpush1.msra.mxu0 %v318
        %458 = vmatprep.subr.mxu0 0.0
        %459 = vmatpush1.msra.mxu0 %v317
        %460 = vmatprep.subr.mxu0 0.0
        %461 = vmatpush1.msra.mxu0 %v316
        %462 = vmatprep.subr.mxu0 0.0
        %463 = vmatpush1.msra.mxu0 %v315
        %464 = vmatprep.subr.mxu0 0.0
        %465 = vmatpush1.msra.mxu0 %v314
        %466 = vmatprep.subr.mxu0 0.0
        %467 = vmatpush1.msra.mxu0 %v313
        %468 = vmatprep.subr.mxu0 0.0
        %469 = vmatpush1.msra.mxu0 %v312
        %470 = vmatprep.subr.mxu0 0.0
        %471 = vmatpush1.msra.mxu0 %v311
        %472 = vmatprep.subr.mxu0 0.0
        %473 = vmatpush1.msra.mxu0 %v310
        %474 = vmatprep.subr.mxu0 0.0
        %475 = vmatpush1.msra.mxu0 %v309
        %476 = vmatprep.subr.mxu0 0.0
        %477 = vmatpush1.msra.mxu0 %v308
        %478 = vmatprep.subr.mxu0 0.0
        %479 = vmatpush1.msra.mxu0 %v307
        %480 = vmatprep.subr.mxu0 0.0
        %481 = vmatpush1.msra.mxu0 %v306
        %482 = vmatprep.subr.mxu0 0.0
        %483 = vmatpush1.msra.mxu0 %v305
        %484 = vmatprep.subr.mxu0 0.0
        %485 = vmatpush1.msra.mxu0 %v304
        %486 = vmatprep.subr.mxu0 0.0
        %487 = vmatpush1.msra.mxu0 %v303
        %488 = vmatprep.subr.mxu0 0.0
        %489 = vmatpush2.msra.mxu0 %v334
        %490 = vmatprep.subr.mxu0 0.0
        %491 = vmatpush2.msra.mxu0 %v333
        %492 = vmatprep.subr.mxu0 0.0
        %493 = vmatpush2.msra.mxu0 %v332
        %494 = vmatprep.subr.mxu0 0.0
        %495 = vmatpush2.msra.mxu0 %v331
        %496 = vmatprep.subr.mxu0 0.0
        %497 = vmatpush2.msra.mxu0 %v330
        %498 = vmatprep.subr.mxu0 0.0
        %499 = vmatpush2.msra.mxu0 %v329
        %500 = vmatprep.subr.mxu0 0.0
        %501 = vmatpush2.msra.mxu0 %v328
        %502 = vmatprep.subr.mxu0 0.0
        %503 = vmatpush2.msra.mxu0 %v327
        %504 = vmatprep.subr.mxu0 0.0
        %505 = vmatpush2.msra.mxu0 %v326
        %506 = vmatprep.subr.mxu0 0.0
        %507 = vmatpush2.msra.mxu0 %v325
        %508 = vmatprep.subr.mxu0 0.0
        %509 = vmatpush2.msra.mxu0 %v324
        %510 = vmatprep.subr.mxu0 0.0
        %511 = vmatpush2.msra.mxu0 %v323
        %512 = vmatprep.subr.mxu0 0.0
        %513 = vmatpush2.msra.mxu0 %v322
        %514 = vmatprep.subr.mxu0 0.0
        %515 = vmatpush2.msra.mxu0 %v321
        %516 = vmatprep.subr.mxu0 0.0
        %517 = vmatpush2.msra.mxu0 %v320
        %518 = vmatprep.subr.mxu0 0.0
        %519 = vmatpush2.msra.mxu0 %v319
        %520 = vmatprep.mubr.f32.mxu0 %v437
        %521 = vmatmul.mubr.f32.gmra.mxu0 %v436
        %v522 = vpop.f32.mrf.mxu0
        %v523 = vadd.f32 0.0, %v522
        %v524 = vpop.f32.mrf.mxu0
        %525 = vmatprep.mubr.f32.mxu0 %v439
        %526 = vmatmul.mubr.f32.gmra.mxu0 %v438
        %v527 = vpop.f32.mrf.mxu0
        %v528 = vadd.f32 0.0, %v527
        %v529 = vpop.f32.mrf.mxu0
        %530 = vmatprep.mubr.f32.mxu0 %v441
        %531 = vmatmul.mubr.f32.gmra.mxu0 %v440
        %v532 = vpop.f32.mrf.mxu0
        %v533 = vadd.f32 0.0, %v532
        %v534 = vpop.f32.mrf.mxu0
        %535 = vmatprep.mubr.f32.mxu0 %v443
        %536 = vmatmul.mubr.f32.gmra.mxu0 %v442
        %v537 = vpop.f32.mrf.mxu0
        %v538 = vadd.f32 0.0, %v537
        %v539 = vpop.f32.mrf.mxu0
        %540 = vdwg.mxu0
        %v541 = vadd.f32 %v452, %v523
        %v542 = vadd.f32 %v453, %v528
        %v543 = vadd.f32 %v454, %v533
        %v544 = vadd.f32 %v455, %v538
        %545 = vst [vmem:[#allocation2] sm:$0xff] %v541
        %546 = vst [vmem:[#allocation2 + $0x8] sm:$0xff] %v542
        %547 = vst [vmem:[#allocation2 + $0x10] sm:$0xff] %v543
        %548 = vst [vmem:[#allocation2 + $0x18] sm:$0xff] %v544
        // Predicated region
        $region49: #{tpu_custom_call.1} parent=35 // pred_check
          %p549 = pneg %p291
        $region50: #{tpu_custom_call.1} parent=35 // pred_check_branch
          %551 = sbr.rel (%p549) target = $region52
        $region51: #{tpu_custom_call.1} parent=35 // pred_region
          %v552 = vld [vmem:[#allocation2] sm:$0xff]
          %v553 = vld [vmem:[#allocation2 + $0x8] sm:$0xff]
          %v554 = vld [vmem:[#allocation2 + $0x10] sm:$0xff]
          %v555 = vld [vmem:[#allocation2 + $0x18] sm:$0xff]
          %v556 = vld [vmem:[%s3] sm:$0x1]
          %v558 = vlaneseq
          %v559 = vshrl.u32 %v558, 7
          %v560 = vsub.s32 0, %v559
          %v561 = vrot.slane %v556, %v560
          %v563 = vadd.f32 %v552, %v561
          %v564 = vadd.f32 %v553, %v561
          %v565 = vadd.f32 %v554, %v561
          %v566 = vadd.f32 %v555, %v561
          %567 = vst [vmem:[#allocation8] sm:$0xff] %v563
          %568 = vst [vmem:[#allocation8 + $0x8] sm:$0xff] %v564
          %569 = vst [vmem:[#allocation8 + $0x10] sm:$0xff] %v565
          %570 = vst [vmem:[#allocation8 + $0x18] sm:$0xff] %v566
        $region52: #{tpu_custom_call.1} parent=35 // pred_fallthru
          _
        %s571 = sand.u32 %s170, 1
        %s572 = scalar_lea.sflag [#allocation10], %s571
        %s573 = sand.u32 %s170, 1
        %s574 = smul.addr %s573, 64
        %s575 = scalar_lea.vmem [#allocation9], %s574
        // Predicated region
        $region53: #{tpu_custom_call.1} parent=35 // pred_check
          %p576 = pneg %p152
        $region54: #{tpu_custom_call.1} parent=35 // pred_check_branch
          %578 = sbr.rel (%p576) target = $region56
        $region55: #{tpu_custom_call.1} parent=35 // pred_region
          %s579 = smul.u32 4, %s27
          %s581 = ssub.s32 512, 512
          %582 = vsyncadd [#allocation5], %s581
          %s583 = smul.addr %s579, 128
          %s584 = scalar_lea.hbm %s4, %s583
          %s585 = sshll.u32 [#allocation8], 4
          %s586 = int_to_ptr.vmem [resolvable:$true] %s585
          %591 = dma.vmem_to_hbm [thread:$0]  %s586, 512, %s584, [#allocation5], 128, 128, 8
        $region56: #{tpu_custom_call.1} parent=35 // pred_fallthru
          _
        // Predicated region
        $region57: #{tpu_custom_call.1} parent=35 // pred_check
          %p592 = pneg %p180
        $region58: #{tpu_custom_call.1} parent=35 // pred_check_branch
          %594 = sbr.rel (%p592) target = $region60
        $region59: #{tpu_custom_call.1} parent=35 // pred_region
          %s595 = smul.u32 4, %s27
          %s596 = smul.u32 2, %s28
          %s598 = ssub.s32 1024, 1024
          %599 = vsyncadd %s572, %s598
          %s600 = smul.addr %s595, 2
          %s601 = sadd.s32 %s596, %s600
          %s602 = smul.addr %s601, 128
          %s603 = scalar_lea.hbm %s5, %s602
          %s604 = sshll.u32 %s575, 4
          %s605 = int_to_ptr.vmem [resolvable:$true] %s604
          %610 = dma.vmem_to_hbm [thread:$0]  %s605, 1024, %s603, %s572, 256, 256, 16
        $region60: #{tpu_custom_call.1} parent=35 // pred_fallthru
          _
        // Predicated region
        $region61: #{tpu_custom_call.1} parent=35 // pred_check
          %p611 = pneg %p152
        $region62: #{tpu_custom_call.1} parent=35 // pred_check_branch
          %613 = sbr.rel (%p611) target = $region64
        $region63: #{tpu_custom_call.1} parent=35 // pred_region
          %614 = dma.done [#allocation5], 512
        $region64: #{tpu_custom_call.1} parent=35 // pred_fallthru
          _
      $region36: #{tpu_custom_call.1} parent=5 // pred_fallthru
        _
      %p615 = scmp.le.s32.totalorder 2, %s18
      // Predicated region
      $region65: #{tpu_custom_call.1} parent=5 // pred_check
        %p616 = pneg %p615
      $region66: #{tpu_custom_call.1} parent=5 // pred_check_branch
        %618 = sbr.rel (%p616) target = $region68
      $region67: #{tpu_custom_call.1} parent=5 // pred_region
        %s619 = ssub.s32 %s18, 2
        // Predicated region
        $region69: #{tpu_custom_call.1} parent=67 // pred_check
          %p620 = pneg %p186
        $region70: #{tpu_custom_call.1} parent=67 // pred_check_branch
          %622 = sbr.rel (%p620) target = $region72
        $region71: #{tpu_custom_call.1} parent=67 // pred_region
          %s623 = sand.u32 %s171, 1
          %s624 = scalar_lea.sflag [#allocation10], %s623
          %s625 = sand.u32 %s171, 1
          %s626 = smul.addr %s625, 64
          %s627 = scalar_lea.vmem [#allocation9], %s626
          %628 = dma.done %s624, 1024
        $region72: #{tpu_custom_call.1} parent=67 // pred_fallthru
          _
      $region68: #{tpu_custom_call.1} parent=5 // pred_fallthru
        _
    $region6: #{tpu_custom_call.1} parent=1 // loop_footer
      %s22 = sadd.s32 1, %s18
    $region7: #{tpu_custom_call.1} parent=1 // loop_footer_branch
      %17 = sbr.rel target = $region3
    $region8: #{tpu_custom_call.1} parent=1 // loop_exit
      _
    %629 = vsyncpa [#allocation4], 1
    %s630 = scalar_lea.sflag [#allocation4], 1
    %631 = vsyncpa %s630, 1
    %632 = vsyncpa [#allocation7], 1
    %633 = vsyncpa [#allocation5], 1
    %s634 = scalar_lea.sflag [#allocation5], 1
    %635 = vsyncpa %s634, 1
    %636 = vsyncpa [#allocation10], 1
    %s637 = scalar_lea.sflag [#allocation10], 1
    %638 = vsyncpa %s637, 1

// kernel: tpu_custom_call.1
$region0: #{tpu_custom_call.1}
  #allocation0 [shape = 'u32[]', space=smem, size = 0x4, offset = 0x4, fixed_abs, tag = 'smem constant byte address 0x4 - core index']
  #allocation1 [shape = 'u32[144,128]{1,0:T(1,128)}', space=vmem, size = 0x12000, scoped, tag = 'internal scratch']
  #allocation2 [shape = 'f32[32,128]{1,0:T(8,128)}', space=vmem, size = 0x4000, scoped, tag = 'scratch operand']
  %s0 = inlined_call_operand.hbm [shape: f32[64,128], index: 0, kind: input, shape index: {}]
  %s1 = inlined_call_operand.hbm [shape: f32[256,128], index: 1, kind: input, shape index: {}]
  %s2 = inlined_call_operand.vmem [shape: f32[1,256], index: 2, kind: input, shape index: {}]
  %s3 = inlined_call_operand.vmem [shape: f32[1,128], index: 3, kind: input, shape index: {}]
  %s4 = inlined_call_operand.hbm [shape: f32[64,128], index: 4, kind: output, shape index: {0}]
  %s5 = inlined_call_operand.hbm [shape: f32[64,256], index: 5, kind: output, shape index: {1}]
  %6 = xla_tuple %s4, %s5
  %s7 = sld [smem:[#allocation0]]
  $region73: #{tpu_custom_call.1} parent=0
    _
  %s9 = ssub.s32 1, %s7
  %s10 = scalar_select 0, %s9, %s7
  $region1: #{tpu_custom_call.1} parent=0
    #allocation3 [shape = 'u8[32768]{0}', space=vmem, size = 0x8000, scoped, tag = 'input window, operand 0']
    #allocation4 [shape = 's32[2]{0}', space=sflag, size = 0x8, scoped, tag = 'scoped memory for tpu_custom_call.1']
    #allocation5 [shape = 's32[2]{0}', space=sflag, size = 0x8, scoped, tag = 'scoped memory for tpu_custom_call.1']
    #allocation6 [shape = 'u8[131072]{0}', space=vmem, size = 0x20000, scoped, tag = 'input window, operand 1, single buffered']
    #allocation7 [shape = 's32[1]{0}', space=sflag, size = 0x4, scoped, tag = 'scoped memory for tpu_custom_call.1']
    #allocation8 [shape = 'u8[32768]{0}', space=vmem, size = 0x8000, scoped, tag = 'output window, operand 0']
    #allocation9 [shape = 'u8[65536]{0}', space=vmem, size = 0x10000, scoped, tag = 'output window, operand 1']
    #allocation10 [shape = 's32[2]{0}', space=sflag, size = 0x8, scoped, tag = 'scoped memory for tpu_custom_call.1']
    %11 = vsyncpa [#allocation4], 0
    %s12 = scalar_lea.sflag [#allocation4], 1
    %13 = vsyncpa %s12, 0
    %14 = vsyncpa [#allocation7], 0
    %15 = vsyncpa [#allocation5], 0
    %s16 = scalar_lea.sflag [#allocation5], 1
    %17 = vsyncpa %s16, 0
    %18 = vsyncpa [#allocation10], 0
    %s19 = scalar_lea.sflag [#allocation10], 1
    %20 = vsyncpa %s19, 0
    loop: start=0, step=1, limit=4
    $region2: #{tpu_custom_call.1} parent=1 // loop_pre_header
      _
    $region3: #{tpu_custom_call.1} parent=1 // loop_header
      %s22 = sphi 0, %s26
      %p23 = scmp.ge.s32.totalorder %s22, 4
      %s29 = sphi 0, %s41
      %s30 = sphi 0, %s37
      %s31 = sphi 0, %s29
      %s32 = sphi 0, %s30
      %s33 = sphi 0, %s31
      %s34 = sphi 0, %s32
      %s44 = sphi 0, %s46
      %s47 = sphi 0, %s44
      %s48 = sphi 0, %s47
      %s64 = sphi 0, %s48
      %s70 = sphi 0, %s72
      %s73 = sphi 0, %s70
      %s74 = sphi 0, %s73
      %s90 = sphi 0, %s74
      %s96 = sphi 0, %s98
      %s99 = sphi 0, %s96
      %s100 = sphi 0, %s99
      %s116 = sphi 0, %s100
      %s120 = sphi 0, %s120
      %s122 = sphi 0, %s120
      %s123 = sphi 0, %s122
      %s137 = sphi 0, %s123
      %s143 = sphi 0, %s145
      %s146 = sphi 0, %s143
      %s147 = sphi 0, %s146
      %s163 = sphi 0, %s147
      %s171 = sphi 0, %s173
      %s174 = sphi 0, %s171
      %s175 = sphi 0, %s174
      %s191 = sphi 0, %s175
    $region4: #{tpu_custom_call.1} parent=1 // loop_header_branch
      %25 = sbr.rel (%p23) target = $region8
    $region5: #{tpu_custom_call.1} parent=1 // loop_body
      %s27 = ssub.s32 %s22, 1
      %s28 = ssub.s32 %s22, 2
      %s35 = sadd.s32 1, %s30
      %p36 = scmp.ge.s32.totalorder %s35, 1
      %s37 = scalar_select %p36, 0, %s35
      %s38 = sadd.s32 1, %s29
      %s39 = scalar_select %p36, %s38, %s29
      %p40 = scmp.ge.s32.totalorder %s39, 2
      %s41 = scalar_select %p40, 0, %s39
      %s42 = ssub.s32 %s29, %s41
      %p43 = scmp.eq.s32.totalorder %s42, 0
      %s45 = sadd.s32 %s44, 1
      %s46 = scalar_select %p43, %s44, %s45
      %p49 = pneg %p43
      %p50 = scmp.eq.s32.totalorder %s22, 1
      %p51 = por %p49, %p50
      %p52 = scmp.ne.s32.totalorder %s44, %s47
      %p53 = scmp.eq.s32.totalorder %s22, 0
      %p54 = por %p52, %p53
      %p55 = scmp.ne.s32.totalorder %s44, %s47
      %p56 = scmp.eq.s32.totalorder %s27, 1
      %p57 = por %p55, %p56
      %p58 = scmp.ne.s32.totalorder %s47, %s48
      %p59 = scmp.eq.s32.totalorder %s27, 0
      %p60 = por %p58, %p59
      %p61 = scmp.ne.s32.totalorder %s47, %s48
      %p62 = scmp.eq.s32.totalorder %s28, 1
      %p63 = por %p61, %p62
      %p65 = scmp.ne.s32.totalorder %s48, %s64
      %p66 = scmp.eq.s32.totalorder %s28, 0
      %p67 = por %p65, %p66
      %s68 = ssub.s32 %s30, %s37
      %p69 = scmp.eq.s32.totalorder %s68, 0
      %s71 = sadd.s32 %s70, 1
      %s72 = scalar_select %p69, %s70, %s71
      %p75 = pneg %p69
      %p76 = scmp.eq.s32.totalorder %s22, 1
      %p77 = por %p75, %p76
      %p78 = scmp.ne.s32.totalorder %s70, %s73
      %p79 = scmp.eq.s32.totalorder %s22, 0
      %p80 = por %p78, %p79
      %p81 = scmp.ne.s32.totalorder %s70, %s73
      %p82 = scmp.eq.s32.totalorder %s27, 1
      %p83 = por %p81, %p82
      %p84 = scmp.ne.s32.totalorder %s73, %s74
      %p85 = scmp.eq.s32.totalorder %s27, 0
      %p86 = por %p84, %p85
      %p87 = scmp.ne.s32.totalorder %s73, %s74
      %p88 = scmp.eq.s32.totalorder %s28, 1
      %p89 = por %p87, %p88
      %p91 = scmp.ne.s32.totalorder %s74, %s90
      %p92 = scmp.eq.s32.totalorder %s28, 0
      %p93 = por %p91, %p92
      %s94 = ssub.s32 %s30, %s37
      %p95 = scmp.eq.s32.totalorder %s94, 0
      %s97 = sadd.s32 %s96, 1
      %s98 = scalar_select %p95, %s96, %s97
      %p101 = pneg %p95
      %p102 = scmp.eq.s32.totalorder %s22, 1
      %p103 = por %p101, %p102
      %p104 = scmp.ne.s32.totalorder %s96, %s99
      %p105 = scmp.eq.s32.totalorder %s22, 0
      %p106 = por %p104, %p105
      %p107 = scmp.ne.s32.totalorder %s96, %s99
      %p108 = scmp.eq.s32.totalorder %s27, 1
      %p109 = por %p107, %p108
      %p110 = scmp.ne.s32.totalorder %s99, %s100
      %p111 = scmp.eq.s32.totalorder %s27, 0
      %p112 = por %p110, %p111
      %p113 = scmp.ne.s32.totalorder %s99, %s100
      %p114 = scmp.eq.s32.totalorder %s28, 1
      %p115 = por %p113, %p114
      %p117 = scmp.ne.s32.totalorder %s100, %s116
      %p118 = scmp.eq.s32.totalorder %s28, 0
      %p119 = por %p117, %p118
      %s121 = sadd.s32 %s120, 1
      %p124 = scmp.eq.s32.totalorder %s22, 1
      %p125 = scmp.ne.s32.totalorder %s120, %s122
      %p126 = scmp.eq.s32.totalorder %s22, 0
      %p127 = por %p125, %p126
      %p128 = scmp.ne.s32.totalorder %s120, %s122
      %p129 = scmp.eq.s32.totalorder %s27, 1
      %p130 = por %p128, %p129
      %p131 = scmp.ne.s32.totalorder %s122, %s123
      %p132 = scmp.eq.s32.totalorder %s27, 0
      %p133 = por %p131, %p132
      %p134 = scmp.ne.s32.totalorder %s122, %s123
      %p135 = scmp.eq.s32.totalorder %s28, 1
      %p136 = por %p134, %p135
      %p138 = scmp.ne.s32.totalorder %s123, %s137
      %p139 = scmp.eq.s32.totalorder %s28, 0
      %p140 = por %p138, %p139
      %s141 = ssub.s32 %s29, %s41
      %p142 = scmp.eq.s32.totalorder %s141, 0
      %s144 = sadd.s32 %s143, 1
      %s145 = scalar_select %p142, %s143, %s144
      %p148 = pneg %p142
      %p149 = scmp.eq.s32.totalorder %s22, 1
      %p150 = por %p148, %p149
      %p151 = scmp.ne.s32.totalorder %s143, %s146
      %p152 = scmp.eq.s32.totalorder %s22, 0
      %p153 = por %p151, %p152
      %p154 = scmp.ne.s32.totalorder %s143, %s146
      %p155 = scmp.eq.s32.totalorder %s27, 1
      %p156 = por %p154, %p155
      %p157 = scmp.ne.s32.totalorder %s146, %s147
      %p158 = scmp.eq.s32.totalorder %s27, 0
      %p159 = por %p157, %p158
      %p160 = scmp.ne.s32.totalorder %s146, %s147
      %p161 = scmp.eq.s32.totalorder %s28, 1
      %p162 = por %p160, %p161
      %p164 = scmp.ne.s32.totalorder %s147, %s163
      %p165 = scmp.eq.s32.totalorder %s28, 0
      %p166 = por %p164, %p165
      %s167 = ssub.s32 %s29, %s41
      %s168 = ssub.s32 %s30, %s37
      %s169 = sor.u32 %s167, %s168
      %p170 = scmp.eq.s32.totalorder %s169, 0
      %s172 = sadd.s32 %s171, 1
      %s173 = scalar_select %p170, %s171, %s172
      %p176 = pneg %p170
      %p177 = scmp.eq.s32.totalorder %s22, 1
      %p178 = por %p176, %p177
      %p179 = scmp.ne.s32.totalorder %s171, %s174
      %p180 = scmp.eq.s32.totalorder %s22, 0
      %p181 = por %p179, %p180
      %p182 = scmp.ne.s32.totalorder %s171, %s174
      %p183 = scmp.eq.s32.totalorder %s27, 1
      %p184 = por %p182, %p183
      %p185 = scmp.ne.s32.totalorder %s174, %s175
      %p186 = scmp.eq.s32.totalorder %s27, 0
      %p187 = por %p185, %p186
      %p188 = scmp.ne.s32.totalorder %s174, %s175
      %p189 = scmp.eq.s32.totalorder %s28, 1
      %p190 = por %p188, %p189
      %p192 = scmp.ne.s32.totalorder %s175, %s191
      %p193 = scmp.eq.s32.totalorder %s28, 0
      %p194 = por %p192, %p193
      %p195 = scmp.le.s32.totalorder 1, %s22
      %p196 = scmp.lt.s32.totalorder %s22, 3
      %p197 = pnand %p195, %p196
      %p198 = pneg %p197
      // Predicated region
      $region9: #{tpu_custom_call.1} parent=5 // pred_check
        _
      $region10: #{tpu_custom_call.1} parent=5 // pred_check_branch
        %200 = sbr.rel (%p197) target = $region12
      $region11: #{tpu_custom_call.1} parent=5 // pred_region
        %s201 = ssub.s32 %s22, 1
        // Predicated region
        $region13: #{tpu_custom_call.1} parent=11 // pred_check
          %p202 = pneg %p86
        $region14: #{tpu_custom_call.1} parent=11 // pred_check_branch
          %204 = sbr.rel (%p202) target = $region16
        $region15: #{tpu_custom_call.1} parent=11 // pred_region
          %s205 = smul.u32 32, %s32
          %s207 = ssub.s32 4096, 4096
          %208 = vsyncadd [#allocation7], %s207
          %s209 = smul.addr %s205, 128
          %s210 = scalar_lea.hbm %s1, %s209
          %s211 = sshll.u32 [#allocation6], 4
          %s212 = int_to_ptr.vmem [resolvable:$true] %s211
          %217 = dma.hbm_to_vmem [thread:$0]  %s210, 4096, %s212, [#allocation7], 128, 128, 8
        $region16: #{tpu_custom_call.1} parent=11 // pred_fallthru
          _
        // Predicated region
        $region17: #{tpu_custom_call.1} parent=11 // pred_check
          %p218 = pneg %p112
        $region18: #{tpu_custom_call.1} parent=11 // pred_check_branch
          %220 = sbr.rel (%p218) target = $region20
        $region19: #{tpu_custom_call.1} parent=11 // pred_region
          %s221 = smul.u32 2, %s32
          %p222 = scmp.lt.s32.totalorder %s221, 1
          %s223 = scalar_select %p222, %s221, 1
          %s224 = scalar_lea.vmem %s2, %s223
          %s225 = smul.u32 2, %s32
        $region20: #{tpu_custom_call.1} parent=11 // pred_fallthru
          _
        // Predicated region
        $region21: #{tpu_custom_call.1} parent=11 // pred_check
          %p226 = pneg %p133
        $region22: #{tpu_custom_call.1} parent=11 // pred_check_branch
          %228 = sbr.rel (%p226) target = $region24
        $region23: #{tpu_custom_call.1} parent=11 // pred_region
          _
        $region24: #{tpu_custom_call.1} parent=11 // pred_fallthru
          _
      $region12: #{tpu_custom_call.1} parent=5 // pred_fallthru
        _
      %p229 = scmp.lt.s32.totalorder %s22, 2
      // Predicated region
      $region25: #{tpu_custom_call.1} parent=5 // pred_check
        %p230 = pneg %p229
      $region26: #{tpu_custom_call.1} parent=5 // pred_check_branch
        %232 = sbr.rel (%p230) target = $region28
      $region27: #{tpu_custom_call.1} parent=5 // pred_region
        // Predicated region
        $region29: #{tpu_custom_call.1} parent=27 // pred_check
          %p233 = pneg %p54
        $region30: #{tpu_custom_call.1} parent=27 // pred_check_branch
          %235 = sbr.rel (%p233) target = $region32
        $region31: #{tpu_custom_call.1} parent=27 // pred_region
          %s236 = sand.u32 %s44, 1
          %s237 = scalar_lea.sflag [#allocation4], %s236
          %s238 = sand.u32 %s44, 1
          %s239 = smul.addr %s238, 32
          %s240 = scalar_lea.vmem [#allocation3], %s239
          %s241 = smul.u32 4, %s29
          %s243 = ssub.s32 512, 512
          %244 = vsyncadd %s237, %s243
          %s245 = smul.addr %s241, 128
          %s246 = scalar_lea.hbm %s0, %s245
          %s247 = sshll.u32 %s240, 4
          %s248 = int_to_ptr.vmem [resolvable:$true] %s247
          %253 = dma.hbm_to_vmem [thread:$0]  %s246, 512, %s248, %s237, 128, 128, 8
        $region32: #{tpu_custom_call.1} parent=27 // pred_fallthru
          _
      $region28: #{tpu_custom_call.1} parent=5 // pred_fallthru
        _
      %p254 = scmp.le.s32.totalorder 1, %s22
      %p255 = scmp.lt.s32.totalorder %s22, 3
      %p256 = pnand %p254, %p255
      %p257 = pneg %p256
      // Predicated region
      $region33: #{tpu_custom_call.1} parent=5 // pred_check
        _
      $region34: #{tpu_custom_call.1} parent=5 // pred_check_branch
        %259 = sbr.rel (%p256) target = $region36
      $region35: #{tpu_custom_call.1} parent=5 // pred_region
        %s260 = ssub.s32 %s22, 1
        %s261 = sand.u32 %s47, 1
        %s262 = scalar_lea.sflag [#allocation4], %s261
        %s263 = sand.u32 %s47, 1
        %s264 = smul.addr %s263, 32
        %s265 = scalar_lea.vmem [#allocation3], %s264
        // Predicated region
        $region37: #{tpu_custom_call.1} parent=35 // pred_check
          %p266 = pneg %p60
        $region38: #{tpu_custom_call.1} parent=35 // pred_check_branch
          %268 = sbr.rel (%p266) target = $region40
        $region39: #{tpu_custom_call.1} parent=35 // pred_region
          %269 = dma.done %s262, 512
        $region40: #{tpu_custom_call.1} parent=35 // pred_fallthru
          _
        // Predicated region
        $region41: #{tpu_custom_call.1} parent=35 // pred_check
          %p270 = pneg %p86
        $region42: #{tpu_custom_call.1} parent=35 // pred_check_branch
          %272 = sbr.rel (%p270) target = $region44
        $region43: #{tpu_custom_call.1} parent=35 // pred_region
          %273 = dma.done [#allocation7], 4096
        $region44: #{tpu_custom_call.1} parent=35 // pred_fallthru
          _
        %s274 = sand.u32 %s47, 1
        %s275 = scalar_lea.sflag [#allocation4], %s274
        %s276 = sand.u32 %s47, 1
        %s277 = smul.addr %s276, 32
        %s278 = scalar_lea.vmem [#allocation3], %s277
        %p279 = pneg %p60
        %p280 = pneg %p57
        %p281 = pneg %p86
        %p282 = pneg %p83
        %s283 = smul.u32 2, %s32
        %p284 = scmp.lt.s32.totalorder %s283, 1
        %s285 = scalar_select %p284, %s283, 1
        %s286 = scalar_lea.vmem %s2, %s285
        %p287 = pneg %p112
        %p288 = pneg %p109
        %p289 = pneg %p133
        %p290 = pneg %p130
        %p291 = pneg %p159
        %p292 = pneg %p156
        %s293 = sand.u32 %s146, 1
        %s294 = scalar_lea.sflag [#allocation5], %s293
        %s295 = sand.u32 %s146, 1
        %s296 = smul.addr %s295, 32
        %s297 = scalar_lea.vmem [#allocation8], %s296
        %p298 = pneg %p187
        %p299 = pneg %p184
        %s300 = sand.u32 %s174, 1
        %s301 = scalar_lea.sflag [#allocation10], %s300
        %s302 = sand.u32 %s174, 1
        %s303 = smul.addr %s302, 64
        %s304 = scalar_lea.vmem [#allocation9], %s303
        %s305 = smul.u32 4, %s31
        %s306 = smul.u32 32, %s32
        %s307 = smul.u32 2, %s32
        %p308 = scmp.lt.s32.totalorder %s307, 1
        %s309 = scalar_select %p308, %s307, 1
        %s310 = scalar_lea.vmem %s2, %s309
        %s311 = smul.u32 2, %s32
        %s312 = smul.u32 4, %s31
        %s313 = smul.u32 4, %s31
        %s314 = smul.u32 2, %s32
        %p315 = scmp.eq.s32.totalorder %s32, 0
        // Predicated region
        $region45: #{tpu_custom_call.1} parent=35 // pred_check
          %p316 = pneg %p315
        $region46: #{tpu_custom_call.1} parent=35 // pred_check_branch
          %318 = sbr.rel (%p316) target = $region48
        $region47: #{tpu_custom_call.1} parent=35 // pred_region
          %319 = vst [vmem:[#allocation2] sm:$0xff] 0.0
          %320 = vst [vmem:[#allocation2 + $0x8] sm:$0xff] 0.0
          %321 = vst [vmem:[#allocation2 + $0x10] sm:$0xff] 0.0
          %322 = vst [vmem:[#allocation2 + $0x18] sm:$0xff] 0.0
        $region48: #{tpu_custom_call.1} parent=35 // pred_fallthru
          _
        %v323 = vld [vmem:[%s265] sm:$0xff]
        %v324 = vld [vmem:[%s265 + $0x8] sm:$0xff]
        %v325 = vld [vmem:[%s265 + $0x10] sm:$0xff]
        %v326 = vld [vmem:[%s265 + $0x18] sm:$0xff]
        %v327 = vld [vmem:[#allocation6] sm:$0xff]
        %v328 = vld [vmem:[#allocation6 + $0x8] sm:$0xff]
        %v329 = vld [vmem:[#allocation6 + $0x10] sm:$0xff]
        %v330 = vld [vmem:[#allocation6 + $0x18] sm:$0xff]
        %v331 = vld [vmem:[#allocation6 + $0x20] sm:$0xff]
        %v332 = vld [vmem:[#allocation6 + $0x28] sm:$0xff]
        %v333 = vld [vmem:[#allocation6 + $0x30] sm:$0xff]
        %v334 = vld [vmem:[#allocation6 + $0x38] sm:$0xff]
        %v335 = vld [vmem:[#allocation6 + $0x40] sm:$0xff]
        %v336 = vld [vmem:[#allocation6 + $0x48] sm:$0xff]
        %v337 = vld [vmem:[#allocation6 + $0x50] sm:$0xff]
        %v338 = vld [vmem:[#allocation6 + $0x58] sm:$0xff]
        %v339 = vld [vmem:[#allocation6 + $0x60] sm:$0xff]
        %v340 = vld [vmem:[#allocation6 + $0x68] sm:$0xff]
        %v341 = vld [vmem:[#allocation6 + $0x70] sm:$0xff]
        %v342 = vld [vmem:[#allocation6 + $0x78] sm:$0xff]
        %v343 = vld [vmem:[#allocation6 + $0x80] sm:$0xff]
        %v344 = vld [vmem:[#allocation6 + $0x88] sm:$0xff]
        %v345 = vld [vmem:[#allocation6 + $0x90] sm:$0xff]
        %v346 = vld [vmem:[#allocation6 + $0x98] sm:$0xff]
        %v347 = vld [vmem:[#allocation6 + $0xa0] sm:$0xff]
        %v348 = vld [vmem:[#allocation6 + $0xa8] sm:$0xff]
        %v349 = vld [vmem:[#allocation6 + $0xb0] sm:$0xff]
        %v350 = vld [vmem:[#allocation6 + $0xb8] sm:$0xff]
        %v351 = vld [vmem:[#allocation6 + $0xc0] sm:$0xff]
        %v352 = vld [vmem:[#allocation6 + $0xc8] sm:$0xff]
        %v353 = vld [vmem:[#allocation6 + $0xd0] sm:$0xff]
        %v354 = vld [vmem:[#allocation6 + $0xd8] sm:$0xff]
        %v355 = vld [vmem:[#allocation6 + $0xe0] sm:$0xff]
        %v356 = vld [vmem:[#allocation6 + $0xe8] sm:$0xff]
        %v357 = vld [vmem:[#allocation6 + $0xf0] sm:$0xff]
        %v358 = vld [vmem:[#allocation6 + $0xf8] sm:$0xff]
        %359 = vmatprep.subr.mxu0 0.0
        %360 = vmatpush1.xpose.msra.mxu0 %v342
        %361 = vmatprep.subr.mxu0 0.0
        %362 = vmatpush1.xpose.msra.mxu0 %v341
        %363 = vmatprep.subr.mxu0 0.0
        %364 = vmatpush1.xpose.msra.mxu0 %v340
        %365 = vmatprep.subr.mxu0 0.0
        %366 = vmatpush1.xpose.msra.mxu0 %v339
        %367 = vmatprep.subr.mxu0 0.0
        %368 = vmatpush1.xpose.msra.mxu0 %v338
        %369 = vmatprep.subr.mxu0 0.0
        %370 = vmatpush1.xpose.msra.mxu0 %v337
        %371 = vmatprep.subr.mxu0 0.0
        %372 = vmatpush1.xpose.msra.mxu0 %v336
        %373 = vmatprep.subr.mxu0 0.0
        %374 = vmatpush1.xpose.msra.mxu0 %v335
        %375 = vmatprep.subr.mxu0 0.0
        %376 = vmatpush1.xpose.msra.mxu0 %v334
        %377 = vmatprep.subr.mxu0 0.0
        %378 = vmatpush1.xpose.msra.mxu0 %v333
        %379 = vmatprep.subr.mxu0 0.0
        %380 = vmatpush1.xpose.msra.mxu0 %v332
        %381 = vmatprep.subr.mxu0 0.0
        %382 = vmatpush1.xpose.msra.mxu0 %v331
        %383 = vmatprep.subr.mxu0 0.0
        %384 = vmatpush1.xpose.msra.mxu0 %v330
        %385 = vmatprep.subr.mxu0 0.0
        %386 = vmatpush1.xpose.msra.mxu0 %v329
        %387 = vmatprep.subr.mxu0 0.0
        %388 = vmatpush1.xpose.msra.mxu0 %v328
        %389 = vmatprep.subr.mxu0 0.0
        %390 = vmatpush1.xpose.msra.mxu0 %v327
        %391 = vmatprep.subr.mxu0 0.0
        %392 = vmatpush2.xpose.msra.mxu0 %v358
        %393 = vmatprep.subr.mxu0 0.0
        %394 = vmatpush2.xpose.msra.mxu0 %v357
        %395 = vmatprep.subr.mxu0 0.0
        %396 = vmatpush2.xpose.msra.mxu0 %v356
        %397 = vmatprep.subr.mxu0 0.0
        %398 = vmatpush2.xpose.msra.mxu0 %v355
        %399 = vmatprep.subr.mxu0 0.0
        %400 = vmatpush2.xpose.msra.mxu0 %v354
        %401 = vmatprep.subr.mxu0 0.0
        %402 = vmatpush2.xpose.msra.mxu0 %v353
        %403 = vmatprep.subr.mxu0 0.0
        %404 = vmatpush2.xpose.msra.mxu0 %v352
        %405 = vmatprep.subr.mxu0 0.0
        %406 = vmatpush2.xpose.msra.mxu0 %v351
        %407 = vmatprep.subr.mxu0 0.0
        %408 = vmatpush2.xpose.msra.mxu0 %v350
        %409 = vmatprep.subr.mxu0 0.0
        %410 = vmatpush2.xpose.msra.mxu0 %v349
        %411 = vmatprep.subr.mxu0 0.0
        %412 = vmatpush2.xpose.msra.mxu0 %v348
        %413 = vmatprep.subr.mxu0 0.0
        %414 = vmatpush2.xpose.msra.mxu0 %v347
        %415 = vmatprep.subr.mxu0 0.0
        %416 = vmatpush2.xpose.msra.mxu0 %v346
        %417 = vmatprep.subr.mxu0 0.0
        %418 = vmatpush2.xpose.msra.mxu0 %v345
        %419 = vmatprep.subr.mxu0 0.0
        %420 = vmatpush2.xpose.msra.mxu0 %v344
        %421 = vmatprep.subr.mxu0 0.0
        %422 = vmatpush2.xpose.msra.mxu0 %v343
        %423 = vmatprep.mubr.f32.mxu0 0.0
        %424 = vmatmul.mubr.f32.gmra.mxu0 %v323
        %v425 = vpop.f32.mrf.mxu0
        %v426 = vadd.f32 0.0, %v425
        %v427 = vpop.f32.mrf.mxu0
        %v428 = vadd.f32 0.0, %v427
        %429 = vmatprep.mubr.f32.mxu0 0.0
        %430 = vmatmul.mubr.f32.gmra.mxu0 %v324
        %v431 = vpop.f32.mrf.mxu0
        %v432 = vadd.f32 0.0, %v431
        %v433 = vpop.f32.mrf.mxu0
        %v434 = vadd.f32 0.0, %v433
        %435 = vmatprep.mubr.f32.mxu0 0.0
        %436 = vmatmul.mubr.f32.gmra.mxu0 %v325
        %v437 = vpop.f32.mrf.mxu0
        %v438 = vadd.f32 0.0, %v437
        %v439 = vpop.f32.mrf.mxu0
        %v440 = vadd.f32 0.0, %v439
        %441 = vmatprep.mubr.f32.mxu0 0.0
        %442 = vmatmul.mubr.f32.gmra.mxu0 %v326
        %v443 = vpop.f32.mrf.mxu0
        %v444 = vadd.f32 0.0, %v443
        %v445 = vpop.f32.mrf.mxu0
        %v446 = vadd.f32 0.0, %v445
        %447 = vdwg.mxu0
        %v448 = vld [vmem:[%s310] sm:$0x3]
        %v450 = vlaneseq
        %v451 = vshrl.u32 %v450, 7
        %v452 = vsub.s32 0, %v451
        %v453 = vrot.slane %v448, %v452
        %v454 = vlaneseq
        %v455 = vshrl.u32 %v454, 7
        %v456 = vsub.s32 1, %v455
        %v457 = vrot.slane %v448, %v456
        %v460 = vmax.f32 %v426, %v453
        %v461 = vmax.f32 %v428, %v457
        %v462 = vmax.f32 %v432, %v453
        %v463 = vmax.f32 %v434, %v457
        %v464 = vmax.f32 %v438, %v453
        %v465 = vmax.f32 %v440, %v457
        %v466 = vmax.f32 %v444, %v453
        %v467 = vmax.f32 %v446, %v457
        %468 = vst [vmem:[%s304] sm:$0xff] %v460
        %469 = vst [vmem:[%s304 + $0x8] sm:$0xff] %v461
        %470 = vst [vmem:[%s304 + $0x10] sm:$0xff] %v462
        %471 = vst [vmem:[%s304 + $0x18] sm:$0xff] %v463
        %472 = vst [vmem:[%s304 + $0x20] sm:$0xff] %v464
        %473 = vst [vmem:[%s304 + $0x28] sm:$0xff] %v465
        %474 = vst [vmem:[%s304 + $0x30] sm:$0xff] %v466
        %475 = vst [vmem:[%s304 + $0x38] sm:$0xff] %v467
        %v476 = vld [vmem:[#allocation2] sm:$0xff]
        %v477 = vld [vmem:[#allocation2 + $0x8] sm:$0xff]
        %v478 = vld [vmem:[#allocation2 + $0x10] sm:$0xff]
        %v479 = vld [vmem:[#allocation2 + $0x18] sm:$0xff]
        %480 = vmatprep.subr.mxu0 0.0
        %481 = vmatpush1.msra.mxu0 %v342
        %482 = vmatprep.subr.mxu0 0.0
        %483 = vmatpush1.msra.mxu0 %v341
        %484 = vmatprep.subr.mxu0 0.0
        %485 = vmatpush1.msra.mxu0 %v340
        %486 = vmatprep.subr.mxu0 0.0
        %487 = vmatpush1.msra.mxu0 %v339
        %488 = vmatprep.subr.mxu0 0.0
        %489 = vmatpush1.msra.mxu0 %v338
        %490 = vmatprep.subr.mxu0 0.0
        %491 = vmatpush1.msra.mxu0 %v337
        %492 = vmatprep.subr.mxu0 0.0
        %493 = vmatpush1.msra.mxu0 %v336
        %494 = vmatprep.subr.mxu0 0.0
        %495 = vmatpush1.msra.mxu0 %v335
        %496 = vmatprep.subr.mxu0 0.0
        %497 = vmatpush1.msra.mxu0 %v334
        %498 = vmatprep.subr.mxu0 0.0
        %499 = vmatpush1.msra.mxu0 %v333
        %500 = vmatprep.subr.mxu0 0.0
        %501 = vmatpush1.msra.mxu0 %v332
        %502 = vmatprep.subr.mxu0 0.0
        %503 = vmatpush1.msra.mxu0 %v331
        %504 = vmatprep.subr.mxu0 0.0
        %505 = vmatpush1.msra.mxu0 %v330
        %506 = vmatprep.subr.mxu0 0.0
        %507 = vmatpush1.msra.mxu0 %v329
        %508 = vmatprep.subr.mxu0 0.0
        %509 = vmatpush1.msra.mxu0 %v328
        %510 = vmatprep.subr.mxu0 0.0
        %511 = vmatpush1.msra.mxu0 %v327
        %512 = vmatprep.subr.mxu0 0.0
        %513 = vmatpush2.msra.mxu0 %v358
        %514 = vmatprep.subr.mxu0 0.0
        %515 = vmatpush2.msra.mxu0 %v357
        %516 = vmatprep.subr.mxu0 0.0
        %517 = vmatpush2.msra.mxu0 %v356
        %518 = vmatprep.subr.mxu0 0.0
        %519 = vmatpush2.msra.mxu0 %v355
        %520 = vmatprep.subr.mxu0 0.0
        %521 = vmatpush2.msra.mxu0 %v354
        %522 = vmatprep.subr.mxu0 0.0
        %523 = vmatpush2.msra.mxu0 %v353
        %524 = vmatprep.subr.mxu0 0.0
        %525 = vmatpush2.msra.mxu0 %v352
        %526 = vmatprep.subr.mxu0 0.0
        %527 = vmatpush2.msra.mxu0 %v351
        %528 = vmatprep.subr.mxu0 0.0
        %529 = vmatpush2.msra.mxu0 %v350
        %530 = vmatprep.subr.mxu0 0.0
        %531 = vmatpush2.msra.mxu0 %v349
        %532 = vmatprep.subr.mxu0 0.0
        %533 = vmatpush2.msra.mxu0 %v348
        %534 = vmatprep.subr.mxu0 0.0
        %535 = vmatpush2.msra.mxu0 %v347
        %536 = vmatprep.subr.mxu0 0.0
        %537 = vmatpush2.msra.mxu0 %v346
        %538 = vmatprep.subr.mxu0 0.0
        %539 = vmatpush2.msra.mxu0 %v345
        %540 = vmatprep.subr.mxu0 0.0
        %541 = vmatpush2.msra.mxu0 %v344
        %542 = vmatprep.subr.mxu0 0.0
        %543 = vmatpush2.msra.mxu0 %v343
        %544 = vmatprep.mubr.f32.mxu0 %v461
        %545 = vmatmul.mubr.f32.gmra.mxu0 %v460
        %v546 = vpop.f32.mrf.mxu0
        %v547 = vadd.f32 0.0, %v546
        %v548 = vpop.f32.mrf.mxu0
        %549 = vmatprep.mubr.f32.mxu0 %v463
        %550 = vmatmul.mubr.f32.gmra.mxu0 %v462
        %v551 = vpop.f32.mrf.mxu0
        %v552 = vadd.f32 0.0, %v551
        %v553 = vpop.f32.mrf.mxu0
        %554 = vmatprep.mubr.f32.mxu0 %v465
        %555 = vmatmul.mubr.f32.gmra.mxu0 %v464
        %v556 = vpop.f32.mrf.mxu0
        %v557 = vadd.f32 0.0, %v556
        %v558 = vpop.f32.mrf.mxu0
        %559 = vmatprep.mubr.f32.mxu0 %v467
        %560 = vmatmul.mubr.f32.gmra.mxu0 %v466
        %v561 = vpop.f32.mrf.mxu0
        %v562 = vadd.f32 0.0, %v561
        %v563 = vpop.f32.mrf.mxu0
        %564 = vdwg.mxu0
        %v565 = vadd.f32 %v476, %v547
        %v566 = vadd.f32 %v477, %v552
        %v567 = vadd.f32 %v478, %v557
        %v568 = vadd.f32 %v479, %v562
        %569 = vst [vmem:[#allocation2] sm:$0xff] %v565
        %570 = vst [vmem:[#allocation2 + $0x8] sm:$0xff] %v566
        %571 = vst [vmem:[#allocation2 + $0x10] sm:$0xff] %v567
        %572 = vst [vmem:[#allocation2 + $0x18] sm:$0xff] %v568
        // Predicated region
        $region49: #{tpu_custom_call.1} parent=35 // pred_check
          %p573 = pneg %p315
        $region50: #{tpu_custom_call.1} parent=35 // pred_check_branch
          %575 = sbr.rel (%p573) target = $region52
        $region51: #{tpu_custom_call.1} parent=35 // pred_region
          %v576 = vld [vmem:[#allocation2] sm:$0xff]
          %v577 = vld [vmem:[#allocation2 + $0x8] sm:$0xff]
          %v578 = vld [vmem:[#allocation2 + $0x10] sm:$0xff]
          %v579 = vld [vmem:[#allocation2 + $0x18] sm:$0xff]
          %v580 = vld [vmem:[%s3] sm:$0x1]
          %v582 = vlaneseq
          %v583 = vshrl.u32 %v582, 7
          %v584 = vsub.s32 0, %v583
          %v585 = vrot.slane %v580, %v584
          %v587 = vadd.f32 %v576, %v585
          %v588 = vadd.f32 %v577, %v585
          %v589 = vadd.f32 %v578, %v585
          %v590 = vadd.f32 %v579, %v585
          %591 = vst [vmem:[%s297] sm:$0xff] %v587
          %592 = vst [vmem:[%s297 + $0x8] sm:$0xff] %v588
          %593 = vst [vmem:[%s297 + $0x10] sm:$0xff] %v589
          %594 = vst [vmem:[%s297 + $0x18] sm:$0xff] %v590
        $region52: #{tpu_custom_call.1} parent=35 // pred_fallthru
          _
        %s595 = sand.u32 %s146, 1
        %s596 = scalar_lea.sflag [#allocation5], %s595
        %s597 = sand.u32 %s146, 1
        %s598 = smul.addr %s597, 32
        %s599 = scalar_lea.vmem [#allocation8], %s598
        %s600 = sand.u32 %s174, 1
        %s601 = scalar_lea.sflag [#allocation10], %s600
        %s602 = sand.u32 %s174, 1
        %s603 = smul.addr %s602, 64
        %s604 = scalar_lea.vmem [#allocation9], %s603
        // Predicated region
        $region53: #{tpu_custom_call.1} parent=35 // pred_check
          %p605 = pneg %p156
        $region54: #{tpu_custom_call.1} parent=35 // pred_check_branch
          %607 = sbr.rel (%p605) target = $region56
        $region55: #{tpu_custom_call.1} parent=35 // pred_region
          %s608 = smul.u32 4, %s31
          %s610 = ssub.s32 512, 512
          %611 = vsyncadd %s596, %s610
          %s612 = smul.addr %s608, 128
          %s613 = scalar_lea.hbm %s4, %s612
          %s614 = sshll.u32 %s599, 4
          %s615 = int_to_ptr.vmem [resolvable:$true] %s614
          %620 = dma.vmem_to_hbm [thread:$0]  %s615, 512, %s613, %s596, 128, 128, 8
        $region56: #{tpu_custom_call.1} parent=35 // pred_fallthru
          _
        // Predicated region
        $region57: #{tpu_custom_call.1} parent=35 // pred_check
          %p621 = pneg %p184
        $region58: #{tpu_custom_call.1} parent=35 // pred_check_branch
          %623 = sbr.rel (%p621) target = $region60
        $region59: #{tpu_custom_call.1} parent=35 // pred_region
          %s624 = smul.u32 4, %s31
          %s625 = smul.u32 2, %s32
          %s627 = ssub.s32 1024, 1024
          %628 = vsyncadd %s601, %s627
          %s629 = smul.addr %s624, 2
          %s630 = sadd.s32 %s625, %s629
          %s631 = smul.addr %s630, 128
          %s632 = scalar_lea.hbm %s5, %s631
          %s633 = sshll.u32 %s604, 4
          %s634 = int_to_ptr.vmem [resolvable:$true] %s633
          %639 = dma.vmem_to_hbm [thread:$0]  %s634, 1024, %s632, %s601, 256, 256, 16
        $region60: #{tpu_custom_call.1} parent=35 // pred_fallthru
          _
      $region36: #{tpu_custom_call.1} parent=5 // pred_fallthru
        _
      %p640 = scmp.le.s32.totalorder 2, %s22
      // Predicated region
      $region61: #{tpu_custom_call.1} parent=5 // pred_check
        %p641 = pneg %p640
      $region62: #{tpu_custom_call.1} parent=5 // pred_check_branch
        %643 = sbr.rel (%p641) target = $region64
      $region63: #{tpu_custom_call.1} parent=5 // pred_region
        %s644 = ssub.s32 %s22, 2
        // Predicated region
        $region65: #{tpu_custom_call.1} parent=63 // pred_check
          %p645 = pneg %p162
        $region66: #{tpu_custom_call.1} parent=63 // pred_check_branch
          %647 = sbr.rel (%p645) target = $region68
        $region67: #{tpu_custom_call.1} parent=63 // pred_region
          %s648 = sand.u32 %s147, 1
          %s649 = scalar_lea.sflag [#allocation5], %s648
          %s650 = sand.u32 %s147, 1
          %s651 = smul.addr %s650, 32
          %s652 = scalar_lea.vmem [#allocation8], %s651
          %653 = dma.done %s649, 512
        $region68: #{tpu_custom_call.1} parent=63 // pred_fallthru
          _
        // Predicated region
        $region69: #{tpu_custom_call.1} parent=63 // pred_check
          %p654 = pneg %p190
        $region70: #{tpu_custom_call.1} parent=63 // pred_check_branch
          %656 = sbr.rel (%p654) target = $region72
        $region71: #{tpu_custom_call.1} parent=63 // pred_region
          %s657 = sand.u32 %s175, 1
          %s658 = scalar_lea.sflag [#allocation10], %s657
          %s659 = sand.u32 %s175, 1
          %s660 = smul.addr %s659, 64
          %s661 = scalar_lea.vmem [#allocation9], %s660
          %662 = dma.done %s658, 1024
        $region72: #{tpu_custom_call.1} parent=63 // pred_fallthru
          _
      $region64: #{tpu_custom_call.1} parent=5 // pred_fallthru
        _
    $region6: #{tpu_custom_call.1} parent=1 // loop_footer
      %s26 = sadd.s32 1, %s22
    $region7: #{tpu_custom_call.1} parent=1 // loop_footer_branch
      %21 = sbr.rel target = $region3
    $region8: #{tpu_custom_call.1} parent=1 // loop_exit
      _
    %663 = vsyncpa [#allocation4], 1
    %s664 = scalar_lea.sflag [#allocation4], 1
    %665 = vsyncpa %s664, 1
    %666 = vsyncpa [#allocation7], 1
    %667 = vsyncpa [#allocation5], 1
    %s668 = scalar_lea.sflag [#allocation5], 1
    %669 = vsyncpa %s668, 1
    %670 = vsyncpa [#allocation10], 1
    %s671 = scalar_lea.sflag [#allocation10], 1
    %672 = vsyncpa %s671, 1

</llo_original>
